<compile_context>
chip_gen: v7x
topology: tpu7x:2x2x1
jax: 0.10.0
libtpu: 0.0.40
codegen_flags: <defaults>
</compile_context>

<pallas_src>
import functools

import jax
import jax.numpy as jnp
from jax.experimental import pallas as pl
from jax.experimental.pallas import tpu as pltpu

VMEM_LIMIT = 48 * 1024 * 1024        # scoped VMEM cap: headroom on v7x (64 MiB phys)
XW_RESIDENT_BYTES = 16 * 1024 * 1024 # keep XW whole-array resident below this size


def _round_up(x, m):
    return ((x + m - 1) // m) * m


def _pad2d(x, rows, cols):
    return jnp.pad(x, ((0, rows - x.shape[0]), (0, cols - x.shape[1])))


def _lane_pad(c):
    # v6e/v7x MXUs are 256 wide: round >128 channels to 256; never over-pad small ones.
    return 128 if c <= 128 else _round_up(c, 256)


def _choose_tiles(n):
    """Pick (n_p, tm, tk) sized to the graph.

    n_p is a multiple of 128; tm/tk divide n_p; tm is shrunk so there are
    >= 2 row tiles whenever possible (keeps both v7x TensorCores busy)."""
    n_p = _round_up(max(n, 1), 128)

    def _largest_tile(cap):
        for t in (512, 256, 128):
            if t <= cap and n_p % t == 0:
                return t
        return 128

    tk = _largest_tile(512)
    tm = _largest_tile(512)
    if n_p // tm < 2:                 # avoid collapsing to a single row tile
        tm = max(64, n_p // 2)        # n_p is a multiple of 128 -> tm mult of 64
    return n_p, tm, tk


# ---------------------------------------------------------------------------
# Kernel 1: XW_s = dinv[:,None] * (X @ W)   (computed once per layer)
# ---------------------------------------------------------------------------
def _xw_kernel(x_ref, w_ref, dinv_ref, o_ref):
    xw = jnp.dot(x_ref[...], w_ref[...], preferred_element_type=jnp.float32)
    o_ref[...] = (xw * dinv_ref[...]).astype(o_ref.dtype)


def xw_matmul(x_p, w_p, dinv, *, tm):
    n_p, cin_p = x_p.shape
    cout_p = w_p.shape[1]
    flops = 2 * n_p * cin_p * cout_p
    bytes_acc = (n_p * cin_p + cin_p * cout_p + n_p * cout_p) * 2 + n_p * 4
    return pl.pallas_call(
        _xw_kernel,
        out_shape=jax.ShapeDtypeStruct((n_p, cout_p), jnp.bfloat16),
        grid_spec=pltpu.PrefetchScalarGridSpec(
            num_scalar_prefetch=0,
            grid=(n_p // tm,),
            in_specs=[
                pl.BlockSpec((tm, cin_p), lambda i: (i, 0)),       # X row tile
                pl.BlockSpec((cin_p, cout_p), lambda i: (0, 0)),   # W (small, resident)
                pl.BlockSpec((tm, 1), lambda i: (i, 0)),           # dinv rows (f32)
            ],
            out_specs=pl.BlockSpec((tm, cout_p), lambda i: (i, 0)),
        ),
        compiler_params=pltpu.CompilerParams(
            dimension_semantics=("parallel",),
            vmem_limit_bytes=VMEM_LIMIT,
        ),
        cost_estimate=pl.CostEstimate(
            flops=int(flops), transcendentals=0, bytes_accessed=int(bytes_acc)),
    )(x_p, w_p, dinv)


# ---------------------------------------------------------------------------
# Kernel 2: out = dinv_row * (A @ XW_s) + b  [+ ReLU]
# ---------------------------------------------------------------------------
def _aggregate_kernel(a_ref, xw_ref, dinv_ref, b_ref, o_ref, acc_ref, *,
                      apply_relu, xw_resident, tk):
    k = pl.program_id(1)

    @pl.when(k == 0)
    def _():
        acc_ref[...] = jnp.zeros_like(acc_ref)

    if xw_resident:
        off = pl.multiple_of(k * tk, tk)          # XW whole-array resident in VMEM
        xw = xw_ref[pl.ds(off, tk), :]
    else:
        xw = xw_ref[...]                           # streamed (tk, cout) tile
    acc_ref[...] += jnp.dot(a_ref[...], xw, preferred_element_type=jnp.float32)

    @pl.when(k == pl.num_programs(1) - 1)
    def _():
        out = acc_ref[...] * dinv_ref[...] + b_ref[...]   # f32 epilogue, once
        if apply_relu:
            out = jnp.maximum(out, 0.0)
        o_ref[...] = out.astype(o_ref.dtype)


def aggregate(a_p, xw_p, dinv, b_p, *, apply_relu, out_dtype, tm, tk):
    n_p = a_p.shape[0]
    cout_p = xw_p.shape[1]
    xw_bytes = n_p * cout_p * 2
    xw_resident = xw_bytes <= XW_RESIDENT_BYTES

    if xw_resident:
        # Constant index_map -> fetched once, no re-streaming per row tile.
        xw_spec = pl.BlockSpec((n_p, cout_p), lambda i, k: (0, 0))
    else:
        xw_spec = pl.BlockSpec((tk, cout_p), lambda i, k: (k, 0))

    kernel = functools.partial(_aggregate_kernel, apply_relu=apply_relu,
                               xw_resident=xw_resident, tk=tk)

    n_row_tiles = n_p // tm
    flops = 2 * n_p * n_p * cout_p
    xw_reads = 1 if xw_resident else n_row_tiles
    bytes_acc = (n_p * n_p * 2                                # A stream (bf16)
                 + xw_reads * xw_bytes                        # XW reads
                 + n_p * cout_p * jnp.dtype(out_dtype).itemsize
                 + n_p * 4 + cout_p * 4)                      # dinv + bias

    return pl.pallas_call(
        kernel,
        out_shape=jax.ShapeDtypeStruct((n_p, cout_p), out_dtype),
        grid_spec=pltpu.PrefetchScalarGridSpec(
            num_scalar_prefetch=0,
            grid=(n_row_tiles, n_p // tk),
            in_specs=[
                pl.BlockSpec((tm, tk), lambda i, k: (i, k)),       # A tile (bf16)
                xw_spec,                                           # XW_s
                pl.BlockSpec((tm, 1), lambda i, k: (i, 0)),        # dinv rows (f32)
                pl.BlockSpec((1, cout_p), lambda i, k: (0, 0)),    # bias (f32)
            ],
            out_specs=pl.BlockSpec((tm, cout_p), lambda i, k: (i, 0)),
            scratch_shapes=[pltpu.VMEM((tm, cout_p), jnp.float32)],
        ),
        compiler_params=pltpu.CompilerParams(
            dimension_semantics=("parallel", "arbitrary"),
            vmem_limit_bytes=VMEM_LIMIT,
        ),
        cost_estimate=pl.CostEstimate(
            flops=int(flops), transcendentals=0, bytes_accessed=int(bytes_acc)),
    )(a_p, xw_p, dinv, b_p)


# ---------------------------------------------------------------------------
# Glue: un-normalized (A + remaining self loops) at padded size + dinv vector.
# Matches torch_geometric GCNConv defaults (scatter-ADD, add_remaining_self_loops).
# ---------------------------------------------------------------------------
def build_adj_and_dinv(edge_index, num_nodes, n_p):
    src = edge_index[0]
    dst = edge_index[1]
    a = jnp.zeros((n_p, n_p), dtype=jnp.float32)
    # message src -> dst  =>  A[dst, src] += 1   (multigraph-safe)
    a = a.at[dst, src].add(1.0)
    # add remaining self loops (only where missing, only for real nodes)
    idx = jnp.arange(n_p)
    diag = jnp.diagonal(a)
    add_self = jnp.where((idx < num_nodes) & (diag == 0.0), 1.0, 0.0)
    a = a.at[idx, idx].add(add_self)
    deg = jnp.sum(a, axis=1)
    dinv = jnp.where(deg > 0, jax.lax.rsqrt(deg), 0.0).astype(jnp.float32)
    # A stays un-normalized -> exact in bf16 (small integer counts)
    return a.astype(jnp.bfloat16), dinv.reshape(n_p, 1)


# ---------------------------------------------------------------------------
# GNN forward: two GCN layers with ReLU in between
# ---------------------------------------------------------------------------
def gnn_forward(x, edge_index, params):
    n, cin = x.shape
    hid = params["w1"].shape[1]
    cout = params["w2"].shape[1]

    n_p, tm, tk = _choose_tiles(n)
    cin_p = _lane_pad(cin)
    hid_p = _lane_pad(hid)
    cout_p = _lane_pad(cout)

    a_p, dinv = build_adj_and_dinv(edge_index, n, n_p)

    x_p = _pad2d(x, n_p, cin_p).astype(jnp.bfloat16)
    w1_p = _pad2d(params["w1"], cin_p, hid_p).astype(jnp.bfloat16)
    w2_p = _pad2d(params["w2"], hid_p, cout_p).astype(jnp.bfloat16)
    b1_p = _pad2d(params["b1"], 1, hid_p)            # bias kept f32 (epilogue)
    b2_p = _pad2d(params["b2"], 1, cout_p)

    # layer 1: h = relu(dinv_row * (A @ (dinv * (X @ W1))) + b1)
    xw1 = xw_matmul(x_p, w1_p, dinv, tm=tm)
    h_p = aggregate(a_p, xw1, dinv, b1_p, apply_relu=True,
                    out_dtype=jnp.bfloat16, tm=tm, tk=tk)

    # layer 2: out = dinv_row * (A @ (dinv * (h @ W2))) + b2
    xw2 = xw_matmul(h_p, w2_p, dinv, tm=tm)
    out_p = aggregate(a_p, xw2, dinv, b2_p, apply_relu=False,
                      out_dtype=jnp.float32, tm=tm, tk=tk)

    return out_p[:n, :cout]


def init_params(key, in_channels, hidden_channels, out_channels):
    k1, k2 = jax.random.split(key)
    # Glorot uniform for weights (GCNConv default), zeros for bias
    s1 = jnp.sqrt(6.0 / (in_channels + hidden_channels))
    s2 = jnp.sqrt(6.0 / (hidden_channels + out_channels))
    return {
        "w1": jax.random.uniform(k1, (in_channels, hidden_channels),
                                 jnp.float32, -s1, s1),
        "b1": jnp.zeros((1, hidden_channels), jnp.float32),
        "w2": jax.random.uniform(k2, (hidden_channels, out_channels),
                                 jnp.float32, -s2, s2),
        "b2": jnp.zeros((1, out_channels), jnp.float32),
    }


if __name__ == "__main__":
    key = jax.random.PRNGKey(0)
    kx, kp = jax.random.split(key)

    num_nodes = 16
    in_channels, hidden_channels, out_channels = 8, 32, 4

    # deterministic node features
    x = jax.random.normal(kx, (num_nodes, in_channels), jnp.float32)

    # deterministic edge_index: bidirectional ring graph (2, E)
    src = jnp.arange(num_nodes, dtype=jnp.int32)
    dst = (src + 1) % num_nodes
    edge_index = jnp.stack(
        [jnp.concatenate([src, dst]), jnp.concatenate([dst, src])], axis=0
    )

    params = init_params(kp, in_channels, hidden_channels, out_channels)

    fwd = jax.jit(gnn_forward)
    out = fwd(x, edge_index, params)
    out = jax.block_until_ready(out)
    assert out.shape == (num_nodes, out_channels)
    assert bool(jnp.all(jnp.isfinite(out)))
    print("KERNEL_OK")
</pallas_src>

<mosaic_0001>
module attributes {stable_mosaic.version = 11 : i64} {
  func.func private @main(%arg0: i32) attributes {dimension_semantics = [#tpu.dimension_semantics<core_parallel>], iteration_bounds = array<i64: 2>, tpu.core_type = #tpu.core_type<sc_scalar_subcore>, window_params = []} {
    return
  }
}

module attributes {stable_mosaic.version = 11 : i64} {
  func.func private @main(%arg0: i32) attributes {dimension_semantics = [#tpu.dimension_semantics<core_parallel>], iteration_bounds = array<i64: 2>, tpu.core_type = #tpu.core_type<sc_scalar_subcore>, window_params = []} {
    return
  }
}

module attributes {stable_mosaic.version = 11 : i64} {
  func.func @_aggregate_kernel(%arg0: i32, %arg1: i32, %arg2: memref<64x128xbf16, #tpu.memory_space<vmem>>, %arg3: memref<128x128xbf16, #tpu.memory_space<vmem>>, %arg4: memref<64x1xf32, #tpu.memory_space<vmem>>, %arg5: memref<1x128xf32, #tpu.memory_space<vmem>>, %arg6: memref<64x128xf32, #tpu.memory_space<vmem>>, %arg7: memref<64x128xf32, #tpu.memory_space<vmem>>) attributes {dimension_semantics = [#tpu.dimension_semantics<parallel>, #tpu.dimension_semantics<arbitrary>], iteration_bounds = array<i64: 2, 1>, scalar_prefetch = 0 : i64, scratch_operands = 1 : i64, tpu.core_type = #tpu.core_type<tc>, window_params = [{transform_indices = @transform_0, window_bounds = array<i64: 64, 128>}, {pipeline_mode = #tpu.pipeline_mode<synchronous>, transform_indices = @transform_1, window_bounds = array<i64: 128, 128>}, {transform_indices = @transform_2, window_bounds = array<i64: 64, 1>}, {pipeline_mode = #tpu.pipeline_mode<synchronous>, transform_indices = @transform_3, window_bounds = array<i64: 1, 128>}, {transform_indices = @transform_4, window_bounds = array<i64: 64, 128>}]} {
    %c0_i32 = arith.constant 0 : i32
    %0 = arith.cmpi eq, %arg1, %c0_i32 : i32
    %1 = arith.extui %0 : i1 to i32
    %c0_i32_0 = arith.constant 0 : i32
    %2 = arith.cmpi ne, %1, %c0_i32_0 : i32
    scf.if %2 {
      %cst_9 = arith.constant 0.000000e+00 : f32
      %15 = vector.broadcast %cst_9 : f32 to vector<64x128xf32>
      %c0_10 = arith.constant 0 : index
      %c0_11 = arith.constant 0 : index
      %16 = vector.load %arg7[%c0_10, %c0_11] : memref<64x128xf32, #tpu.memory_space<vmem>>, vector<64x128xf32>
      tpu.vector_store %arg7[%c0_10, %c0_11], %15 {strides = array<i32>} : memref<64x128xf32, #tpu.memory_space<vmem>>, vector<64x128xf32>,
    } else {
    }
    %c128_i32 = arith.constant 128 : i32
    %3 = arith.muli %arg1, %c128_i32 : i32
    %4 = tpu.assume_multiple %3, 128 : i32
    %5 = arith.index_cast %4 : i32 to index
    %c0 = arith.constant 0 : index
    %6 = vector.load %arg3[%5, %c0] : memref<128x128xbf16, #tpu.memory_space<vmem>>, vector<128x128xbf16>
    %c0_1 = arith.constant 0 : index
    %c0_2 = arith.constant 0 : index
    %7 = vector.load %arg7[%c0_1, %c0_2] : memref<64x128xf32, #tpu.memory_space<vmem>>, vector<64x128xf32>
    %c0_3 = arith.constant 0 : index
    %c0_4 = arith.constant 0 : index
    %8 = vector.load %arg2[%c0_3, %c0_4] : memref<64x128xbf16, #tpu.memory_space<vmem>>, vector<64x128xbf16>
    %cst = arith.constant dense<0.000000e+00> : vector<64x128xf32>
    %9 = tpu.matmul %8, %6, %cst {dimension_numbers = #tpu.dot_dimension_numbers<[1], [0], [0], [1], [0, 0, 1, 1], [], []>} : vector<64x128xbf16>, vector<128x128xbf16>, vector<64x128xf32> -> vector<64x128xf32>
    %10 = arith.addf %7, %9 : vector<64x128xf32>
    %c0_5 = arith.constant 0 : index
    %c0_6 = arith.constant 0 : index
    %11 = vector.load %arg7[%c0_5, %c0_6] : memref<64x128xf32, #tpu.memory_space<vmem>>, vector<64x128xf32>
    tpu.vector_store %arg7[%c0_5, %c0_6], %10 {strides = array<i32>} : memref<64x128xf32, #tpu.memory_space<vmem>>, vector<64x128xf32>,
    %c0_i32_7 = arith.constant 0 : i32
    %12 = arith.cmpi eq, %arg1, %c0_i32_7 : i32
    %13 = arith.extui %12 : i1 to i32
    %c0_i32_8 = arith.constant 0 : i32
    %14 = arith.cmpi ne, %13, %c0_i32_8 : i32
    scf.if %14 {
      %c0_9 = arith.constant 0 : index
      %c0_10 = arith.constant 0 : index
      %15 = vector.load %arg7[%c0_9, %c0_10] : memref<64x128xf32, #tpu.memory_space<vmem>>, vector<64x128xf32>
      %c0_11 = arith.constant 0 : index
      %c0_12 = arith.constant 0 : index
      %16 = vector.load %arg4[%c0_11, %c0_12] : memref<64x1xf32, #tpu.memory_space<vmem>>, vector<64x1xf32>
      %17 = vector.broadcast %16 : vector<64x1xf32> to vector<64x128xf32>
      %18 = arith.mulf %15, %17 : vector<64x128xf32>
      %c0_13 = arith.constant 0 : index
      %c0_14 = arith.constant 0 : index
      %19 = vector.load %arg5[%c0_13, %c0_14] : memref<1x128xf32, #tpu.memory_space<vmem>>, vector<1x128xf32>
      %20 = vector.broadcast %19 : vector<1x128xf32> to vector<64x128xf32>
      %21 = arith.addf %18, %20 : vector<64x128xf32>
      %c0_15 = arith.constant 0 : index
      %c0_16 = arith.constant 0 : index
      %22 = vector.load %arg6[%c0_15, %c0_16] : memref<64x128xf32, #tpu.memory_space<vmem>>, vector<64x128xf32>
      tpu.vector_store %arg6[%c0_15, %c0_16], %21 {strides = array<i32>} : memref<64x128xf32, #tpu.memory_space<vmem>>, vector<64x128xf32>,
    } else {
    }
    return
  }
  func.func @transform_0(%arg0: i32, %arg1: i32) -> (i32, i32) {
    %c0_i32 = arith.constant 0 : i32
    return %arg0, %arg1 : i32, i32
  }
  func.func @transform_1(%arg0: i32, %arg1: i32) -> (i32, i32) {
    %c0_i32 = arith.constant 0 : i32
    %c0_i32_0 = arith.constant 0 : i32
    %c0_i32_1 = arith.constant 0 : i32
    return %c0_i32, %c0_i32_0 : i32, i32
  }
  func.func @transform_2(%arg0: i32, %arg1: i32) -> (i32, i32) {
    %c0_i32 = arith.constant 0 : i32
    %c0_i32_0 = arith.constant 0 : i32
    return %arg0, %c0_i32 : i32, i32
  }
  func.func @transform_3(%arg0: i32, %arg1: i32) -> (i32, i32) {
    %c0_i32 = arith.constant 0 : i32
    %c0_i32_0 = arith.constant 0 : i32
    %c0_i32_1 = arith.constant 0 : i32
    return %c0_i32, %c0_i32_0 : i32, i32
  }
  func.func @transform_4(%arg0: i32, %arg1: i32) -> (i32, i32) {
    %c0_i32 = arith.constant 0 : i32
    %c0_i32_0 = arith.constant 0 : i32
    return %arg0, %c0_i32 : i32, i32
  }
}

module attributes {stable_mosaic.version = 11 : i64} {
  func.func @_xw_kernel(%arg0: i32, %arg1: memref<64x128xbf16, #tpu.memory_space<vmem>>, %arg2: memref<128x128xbf16, #tpu.memory_space<vmem>>, %arg3: memref<64x1xf32, #tpu.memory_space<vmem>>, %arg4: memref<64x128xbf16, #tpu.memory_space<vmem>>) attributes {dimension_semantics = [#tpu.dimension_semantics<parallel>], iteration_bounds = array<i64: 2>, scalar_prefetch = 0 : i64, scratch_operands = 0 : i64, tpu.core_type = #tpu.core_type<tc>, window_params = [{transform_indices = @transform_0, window_bounds = array<i64: 64, 128>}, {pipeline_mode = #tpu.pipeline_mode<synchronous>, transform_indices = @transform_1, window_bounds = array<i64: 128, 128>}, {transform_indices = @transform_2, window_bounds = array<i64: 64, 1>}, {transform_indices = @transform_3, window_bounds = array<i64: 64, 128>}]} {
    %c0 = arith.constant 0 : index
    %c0_0 = arith.constant 0 : index
    %0 = vector.load %arg1[%c0, %c0_0] : memref<64x128xbf16, #tpu.memory_space<vmem>>, vector<64x128xbf16>
    %c0_1 = arith.constant 0 : index
    %c0_2 = arith.constant 0 : index
    %1 = vector.load %arg2[%c0_1, %c0_2] : memref<128x128xbf16, #tpu.memory_space<vmem>>, vector<128x128xbf16>
    %cst = arith.constant dense<0.000000e+00> : vector<64x128xf32>
    %2 = tpu.matmul %0, %1, %cst {dimension_numbers = #tpu.dot_dimension_numbers<[1], [0], [0], [1], [0, 0, 1, 1], [], []>} : vector<64x128xbf16>, vector<128x128xbf16>, vector<64x128xf32> -> vector<64x128xf32>
    %c0_3 = arith.constant 0 : index
    %c0_4 = arith.constant 0 : index
    %3 = vector.load %arg3[%c0_3, %c0_4] : memref<64x1xf32, #tpu.memory_space<vmem>>, vector<64x1xf32>
    %4 = vector.broadcast %3 : vector<64x1xf32> to vector<64x128xf32>
    %5 = arith.mulf %2, %4 : vector<64x128xf32>
    %6 = arith.truncf %5 : vector<64x128xf32> to vector<64x128xbf16>
    %c0_5 = arith.constant 0 : index
    %c0_6 = arith.constant 0 : index
    %7 = vector.load %arg4[%c0_5, %c0_6] : memref<64x128xbf16, #tpu.memory_space<vmem>>, vector<64x128xbf16>
    tpu.vector_store %arg4[%c0_5, %c0_6], %6 {strides = array<i32>} : memref<64x128xbf16, #tpu.memory_space<vmem>>, vector<64x128xbf16>,
    return
  }
  func.func @transform_0(%arg0: i32) -> (i32, i32) {
    %c0_i32 = arith.constant 0 : i32
    %c0_i32_0 = arith.constant 0 : i32
    return %arg0, %c0_i32 : i32, i32
  }
  func.func @transform_1(%arg0: i32) -> (i32, i32) {
    %c0_i32 = arith.constant 0 : i32
    %c0_i32_0 = arith.constant 0 : i32
    %c0_i32_1 = arith.constant 0 : i32
    return %c0_i32, %c0_i32_0 : i32, i32
  }
  func.func @transform_2(%arg0: i32) -> (i32, i32) {
    %c0_i32 = arith.constant 0 : i32
    %c0_i32_0 = arith.constant 0 : i32
    return %arg0, %c0_i32 : i32, i32
  }
  func.func @transform_3(%arg0: i32) -> (i32, i32) {
    %c0_i32 = arith.constant 0 : i32
    %c0_i32_0 = arith.constant 0 : i32
    return %arg0, %c0_i32 : i32, i32
  }
}

module attributes {stable_mosaic.version = 11 : i64} {
  func.func @_aggregate_kernel(%arg0: i32, %arg1: i32, %arg2: memref<64x128xbf16, #tpu.memory_space<vmem>>, %arg3: memref<128x128xbf16, #tpu.memory_space<vmem>>, %arg4: memref<64x1xf32, #tpu.memory_space<vmem>>, %arg5: memref<1x128xf32, #tpu.memory_space<vmem>>, %arg6: memref<64x128xbf16, #tpu.memory_space<vmem>>, %arg7: memref<64x128xf32, #tpu.memory_space<vmem>>) attributes {dimension_semantics = [#tpu.dimension_semantics<parallel>, #tpu.dimension_semantics<arbitrary>], iteration_bounds = array<i64: 2, 1>, scalar_prefetch = 0 : i64, scratch_operands = 1 : i64, tpu.core_type = #tpu.core_type<tc>, window_params = [{transform_indices = @transform_0, window_bounds = array<i64: 64, 128>}, {pipeline_mode = #tpu.pipeline_mode<synchronous>, transform_indices = @transform_1, window_bounds = array<i64: 128, 128>}, {transform_indices = @transform_2, window_bounds = array<i64: 64, 1>}, {pipeline_mode = #tpu.pipeline_mode<synchronous>, transform_indices = @transform_3, window_bounds = array<i64: 1, 128>}, {transform_indices = @transform_4, window_bounds = array<i64: 64, 128>}]} {
    %c0_i32 = arith.constant 0 : i32
    %0 = arith.cmpi eq, %arg1, %c0_i32 : i32
    %1 = arith.extui %0 : i1 to i32
    %c0_i32_0 = arith.constant 0 : i32
    %2 = arith.cmpi ne, %1, %c0_i32_0 : i32
    scf.if %2 {
      %cst_9 = arith.constant 0.000000e+00 : f32
      %15 = vector.broadcast %cst_9 : f32 to vector<64x128xf32>
      %c0_10 = arith.constant 0 : index
      %c0_11 = arith.constant 0 : index
      %16 = vector.load %arg7[%c0_10, %c0_11] : memref<64x128xf32, #tpu.memory_space<vmem>>, vector<64x128xf32>
      tpu.vector_store %arg7[%c0_10, %c0_11], %15 {strides = array<i32>} : memref<64x128xf32, #tpu.memory_space<vmem>>, vector<64x128xf32>,
    } else {
    }
    %c128_i32 = arith.constant 128 : i32
    %3 = arith.muli %arg1, %c128_i32 : i32
    %4 = tpu.assume_multiple %3, 128 : i32
    %5 = arith.index_cast %4 : i32 to index
    %c0 = arith.constant 0 : index
    %6 = vector.load %arg3[%5, %c0] : memref<128x128xbf16, #tpu.memory_space<vmem>>, vector<128x128xbf16>
    %c0_1 = arith.constant 0 : index
    %c0_2 = arith.constant 0 : index
    %7 = vector.load %arg7[%c0_1, %c0_2] : memref<64x128xf32, #tpu.memory_space<vmem>>, vector<64x128xf32>
    %c0_3 = arith.constant 0 : index
    %c0_4 = arith.constant 0 : index
    %8 = vector.load %arg2[%c0_3, %c0_4] : memref<64x128xbf16, #tpu.memory_space<vmem>>, vector<64x128xbf16>
    %cst = arith.constant dense<0.000000e+00> : vector<64x128xf32>
    %9 = tpu.matmul %8, %6, %cst {dimension_numbers = #tpu.dot_dimension_numbers<[1], [0], [0], [1], [0, 0, 1, 1], [], []>} : vector<64x128xbf16>, vector<128x128xbf16>, vector<64x128xf32> -> vector<64x128xf32>
    %10 = arith.addf %7, %9 : vector<64x128xf32>
    %c0_5 = arith.constant 0 : index
    %c0_6 = arith.constant 0 : index
    %11 = vector.load %arg7[%c0_5, %c0_6] : memref<64x128xf32, #tpu.memory_space<vmem>>, vector<64x128xf32>
    tpu.vector_store %arg7[%c0_5, %c0_6], %10 {strides = array<i32>} : memref<64x128xf32, #tpu.memory_space<vmem>>, vector<64x128xf32>,
    %c0_i32_7 = arith.constant 0 : i32
    %12 = arith.cmpi eq, %arg1, %c0_i32_7 : i32
    %13 = arith.extui %12 : i1 to i32
    %c0_i32_8 = arith.constant 0 : i32
    %14 = arith.cmpi ne, %13, %c0_i32_8 : i32
    scf.if %14 {
      %c0_9 = arith.constant 0 : index
      %c0_10 = arith.constant 0 : index
      %15 = vector.load %arg7[%c0_9, %c0_10] : memref<64x128xf32, #tpu.memory_space<vmem>>, vector<64x128xf32>
      %c0_11 = arith.constant 0 : index
      %c0_12 = arith.constant 0 : index
      %16 = vector.load %arg4[%c0_11, %c0_12] : memref<64x1xf32, #tpu.memory_space<vmem>>, vector<64x1xf32>
      %17 = vector.broadcast %16 : vector<64x1xf32> to vector<64x128xf32>
      %18 = arith.mulf %15, %17 : vector<64x128xf32>
      %c0_13 = arith.constant 0 : index
      %c0_14 = arith.constant 0 : index
      %19 = vector.load %arg5[%c0_13, %c0_14] : memref<1x128xf32, #tpu.memory_space<vmem>>, vector<1x128xf32>
      %20 = vector.broadcast %19 : vector<1x128xf32> to vector<64x128xf32>
      %21 = arith.addf %18, %20 : vector<64x128xf32>
      %cst_15 = arith.constant 0.000000e+00 : f32
      %22 = vector.broadcast %cst_15 : f32 to vector<64x128xf32>
      %23 = arith.maximumf %21, %22 : vector<64x128xf32>
      %24 = arith.truncf %23 : vector<64x128xf32> to vector<64x128xbf16>
      %c0_16 = arith.constant 0 : index
      %c0_17 = arith.constant 0 : index
      %25 = vector.load %arg6[%c0_16, %c0_17] : memref<64x128xbf16, #tpu.memory_space<vmem>>, vector<64x128xbf16>
      tpu.vector_store %arg6[%c0_16, %c0_17], %24 {strides = array<i32>} : memref<64x128xbf16, #tpu.memory_space<vmem>>, vector<64x128xbf16>,
    } else {
    }
    return
  }
  func.func @transform_0(%arg0: i32, %arg1: i32) -> (i32, i32) {
    %c0_i32 = arith.constant 0 : i32
    return %arg0, %arg1 : i32, i32
  }
  func.func @transform_1(%arg0: i32, %arg1: i32) -> (i32, i32) {
    %c0_i32 = arith.constant 0 : i32
    %c0_i32_0 = arith.constant 0 : i32
    %c0_i32_1 = arith.constant 0 : i32
    return %c0_i32, %c0_i32_0 : i32, i32
  }
  func.func @transform_2(%arg0: i32, %arg1: i32) -> (i32, i32) {
    %c0_i32 = arith.constant 0 : i32
    %c0_i32_0 = arith.constant 0 : i32
    return %arg0, %c0_i32 : i32, i32
  }
  func.func @transform_3(%arg0: i32, %arg1: i32) -> (i32, i32) {
    %c0_i32 = arith.constant 0 : i32
    %c0_i32_0 = arith.constant 0 : i32
    %c0_i32_1 = arith.constant 0 : i32
    return %c0_i32, %c0_i32_0 : i32, i32
  }
  func.func @transform_4(%arg0: i32, %arg1: i32) -> (i32, i32) {
    %c0_i32 = arith.constant 0 : i32
    %c0_i32_0 = arith.constant 0 : i32
    return %arg0, %c0_i32 : i32, i32
  }
}

</mosaic_0001>

<llo_original>
// kernel: gnn_forward.4
$region0: #{gnn_forward.4}
  #allocation0 [shape = 'u32[]', space=smem, size = 0x4, offset = 0x4, fixed_abs, tag = 'smem constant byte address 0x4 - core index']
  #allocation1 [shape = 'u32[144,128]{1,0:T(1,128)}', space=vmem, size = 0x12000, scoped, tag = 'internal scratch']
  %s0 = inlined_call_operand.vmem [shape: bf16[128,128], index: 0, kind: input, shape index: {}]
  %s1 = inlined_call_operand.vmem [shape: bf16[128,128], index: 1, kind: input, shape index: {}]
  %s2 = inlined_call_operand.vmem [shape: f32[128,1], index: 2, kind: input, shape index: {}]
  %s3 = inlined_call_operand.vmem [shape: bf16[128,128], index: 3, kind: output, shape index: {}]
  %s4 = sld [smem:[#allocation0]]
  $region45: #{gnn_forward.4} parent=0
    _
  %s6 = ssub.s32 1, %s4
  %s7 = scalar_select 0, %s6, %s4
  loop: start=0, step=1, limit=4
  $region2: #{gnn_forward.4} parent=0 // loop_pre_header
    _
  $region3: #{gnn_forward.4} parent=0 // loop_header
    %s9 = sphi 0, %s13
    %p10 = scmp.ge.s32.totalorder %s9, 4
    %s19 = sphi 0, %s21
    %s22 = sphi 0, %s19
    %s23 = sphi 0, %s22
    %s39 = sphi 0, %s23
    %s43 = sphi 0, %s43
    %s45 = sphi 0, %s43
    %s46 = sphi 0, %s45
    %s60 = sphi 0, %s46
    %s66 = sphi 0, %s68
    %s69 = sphi 0, %s66
    %s70 = sphi 0, %s69
    %s86 = sphi 0, %s70
    %s92 = sphi 0, %s94
    %s95 = sphi 0, %s92
    %s96 = sphi 0, %s95
    %s112 = sphi 0, %s96
  $region4: #{gnn_forward.4} parent=0 // loop_header_branch
    %12 = sbr.rel (%p10) target = $region8
  $region5: #{gnn_forward.4} parent=0 // loop_body
    %s14 = ssub.s32 %s9, 1
    %s15 = ssub.s32 %s9, 2
    %s16 = sadd.s32 %s9, 1
    %s17 = ssub.s32 %s9, %s16
    %p18 = scmp.eq.s32.totalorder %s17, 0
    %s20 = sadd.s32 %s19, 1
    %s21 = scalar_select %p18, %s19, %s20
    %p24 = pneg %p18
    %p25 = scmp.eq.s32.totalorder %s9, 1
    %p26 = por %p24, %p25
    %p27 = scmp.ne.s32.totalorder %s19, %s22
    %p28 = scmp.eq.s32.totalorder %s9, 0
    %p29 = por %p27, %p28
    %p30 = scmp.ne.s32.totalorder %s19, %s22
    %p31 = scmp.eq.s32.totalorder %s14, 1
    %p32 = por %p30, %p31
    %p33 = scmp.ne.s32.totalorder %s22, %s23
    %p34 = scmp.eq.s32.totalorder %s14, 0
    %p35 = por %p33, %p34
    %p36 = scmp.ne.s32.totalorder %s22, %s23
    %p37 = scmp.eq.s32.totalorder %s15, 1
    %p38 = por %p36, %p37
    %p40 = scmp.ne.s32.totalorder %s23, %s39
    %p41 = scmp.eq.s32.totalorder %s15, 0
    %p42 = por %p40, %p41
    %s44 = sadd.s32 %s43, 1
    %p47 = scmp.eq.s32.totalorder %s9, 1
    %p48 = scmp.ne.s32.totalorder %s43, %s45
    %p49 = scmp.eq.s32.totalorder %s9, 0
    %p50 = por %p48, %p49
    %p51 = scmp.ne.s32.totalorder %s43, %s45
    %p52 = scmp.eq.s32.totalorder %s14, 1
    %p53 = por %p51, %p52
    %p54 = scmp.ne.s32.totalorder %s45, %s46
    %p55 = scmp.eq.s32.totalorder %s14, 0
    %p56 = por %p54, %p55
    %p57 = scmp.ne.s32.totalorder %s45, %s46
    %p58 = scmp.eq.s32.totalorder %s15, 1
    %p59 = por %p57, %p58
    %p61 = scmp.ne.s32.totalorder %s46, %s60
    %p62 = scmp.eq.s32.totalorder %s15, 0
    %p63 = por %p61, %p62
    %s64 = ssub.s32 %s9, %s16
    %p65 = scmp.eq.s32.totalorder %s64, 0
    %s67 = sadd.s32 %s66, 1
    %s68 = scalar_select %p65, %s66, %s67
    %p71 = pneg %p65
    %p72 = scmp.eq.s32.totalorder %s9, 1
    %p73 = por %p71, %p72
    %p74 = scmp.ne.s32.totalorder %s66, %s69
    %p75 = scmp.eq.s32.totalorder %s9, 0
    %p76 = por %p74, %p75
    %p77 = scmp.ne.s32.totalorder %s66, %s69
    %p78 = scmp.eq.s32.totalorder %s14, 1
    %p79 = por %p77, %p78
    %p80 = scmp.ne.s32.totalorder %s69, %s70
    %p81 = scmp.eq.s32.totalorder %s14, 0
    %p82 = por %p80, %p81
    %p83 = scmp.ne.s32.totalorder %s69, %s70
    %p84 = scmp.eq.s32.totalorder %s15, 1
    %p85 = por %p83, %p84
    %p87 = scmp.ne.s32.totalorder %s70, %s86
    %p88 = scmp.eq.s32.totalorder %s15, 0
    %p89 = por %p87, %p88
    %s90 = ssub.s32 %s9, %s16
    %p91 = scmp.eq.s32.totalorder %s90, 0
    %s93 = sadd.s32 %s92, 1
    %s94 = scalar_select %p91, %s92, %s93
    %p97 = pneg %p91
    %p98 = scmp.eq.s32.totalorder %s9, 1
    %p99 = por %p97, %p98
    %p100 = scmp.ne.s32.totalorder %s92, %s95
    %p101 = scmp.eq.s32.totalorder %s9, 0
    %p102 = por %p100, %p101
    %p103 = scmp.ne.s32.totalorder %s92, %s95
    %p104 = scmp.eq.s32.totalorder %s14, 1
    %p105 = por %p103, %p104
    %p106 = scmp.ne.s32.totalorder %s95, %s96
    %p107 = scmp.eq.s32.totalorder %s14, 0
    %p108 = por %p106, %p107
    %p109 = scmp.ne.s32.totalorder %s95, %s96
    %p110 = scmp.eq.s32.totalorder %s15, 1
    %p111 = por %p109, %p110
    %p113 = scmp.ne.s32.totalorder %s96, %s112
    %p114 = scmp.eq.s32.totalorder %s15, 0
    %p115 = por %p113, %p114
    %p116 = scmp.le.s32.totalorder 1, %s9
    %p117 = scmp.lt.s32.totalorder %s9, 3
    %p118 = pnand %p116, %p117
    %p119 = pneg %p118
    // Predicated region
    $region9: #{gnn_forward.4} parent=5 // pred_check
      _
    $region10: #{gnn_forward.4} parent=5 // pred_check_branch
      %121 = sbr.rel (%p118) target = $region12
    $region11: #{gnn_forward.4} parent=5 // pred_region
      %s122 = ssub.s32 %s9, 1
      // Predicated region
      $region13: #{gnn_forward.4} parent=11 // pred_check
        %p123 = pneg %p56
      $region14: #{gnn_forward.4} parent=11 // pred_check_branch
        %125 = sbr.rel (%p123) target = $region16
      $region15: #{gnn_forward.4} parent=11 // pred_region
        _
      $region16: #{gnn_forward.4} parent=11 // pred_fallthru
        _
    $region12: #{gnn_forward.4} parent=5 // pred_fallthru
      _
    %p126 = scmp.lt.s32.totalorder %s9, 2
    // Predicated region
    $region17: #{gnn_forward.4} parent=5 // pred_check
      %p127 = pneg %p126
    $region18: #{gnn_forward.4} parent=5 // pred_check_branch
      %129 = sbr.rel (%p127) target = $region20
    $region19: #{gnn_forward.4} parent=5 // pred_region
      // Predicated region
      $region21: #{gnn_forward.4} parent=19 // pred_check
        %p130 = pneg %p29
      $region22: #{gnn_forward.4} parent=19 // pred_check_branch
        %132 = sbr.rel (%p130) target = $region24
      $region23: #{gnn_forward.4} parent=19 // pred_region
        %s133 = smul.u32 8, %s9
        %p134 = scmp.lt.s32.totalorder %s133, 15
        %s135 = scalar_select %p134, %s133, 15
        %s136 = smul.addr %s135, 4
        %s137 = scalar_lea.vmem %s0, %s136
        %s138 = smul.u32 8, %s9
      $region24: #{gnn_forward.4} parent=19 // pred_fallthru
        _
      // Predicated region
      $region25: #{gnn_forward.4} parent=19 // pred_check
        %p139 = pneg %p76
      $region26: #{gnn_forward.4} parent=19 // pred_check_branch
        %141 = sbr.rel (%p139) target = $region28
      $region27: #{gnn_forward.4} parent=19 // pred_region
        %s142 = smul.u32 8, %s9
        %p143 = scmp.lt.s32.totalorder %s142, 15
        %s144 = scalar_select %p143, %s142, 15
        %s145 = smul.addr %s144, 8
        %s146 = scalar_lea.vmem %s2, %s145
        %s147 = smul.u32 8, %s9
      $region28: #{gnn_forward.4} parent=19 // pred_fallthru
        _
    $region20: #{gnn_forward.4} parent=5 // pred_fallthru
      _
    %p148 = scmp.le.s32.totalorder 1, %s9
    %p149 = scmp.lt.s32.totalorder %s9, 3
    %p150 = pnand %p148, %p149
    %p151 = pneg %p150
    // Predicated region
    $region29: #{gnn_forward.4} parent=5 // pred_check
      _
    $region30: #{gnn_forward.4} parent=5 // pred_check_branch
      %153 = sbr.rel (%p150) target = $region32
    $region31: #{gnn_forward.4} parent=5 // pred_region
      %s154 = ssub.s32 %s9, 1
      %s155 = smul.u32 8, %s14
      %p156 = scmp.lt.s32.totalorder %s155, 15
      %s157 = scalar_select %p156, %s155, 15
      %s158 = smul.addr %s157, 4
      %s159 = scalar_lea.vmem %s0, %s158
      %p160 = pneg %p35
      %p161 = pneg %p32
      %p162 = pneg %p56
      %p163 = pneg %p53
      %s164 = smul.u32 8, %s14
      %p165 = scmp.lt.s32.totalorder %s164, 15
      %s166 = scalar_select %p165, %s164, 15
      %s167 = smul.addr %s166, 8
      %s168 = scalar_lea.vmem %s2, %s167
      %p169 = pneg %p82
      %p170 = pneg %p79
      %p171 = pneg %p108
      %p172 = pneg %p105
      %s173 = smul.u32 8, %s14
      %p174 = scmp.lt.s32.totalorder %s173, 15
      %s175 = scalar_select %p174, %s173, 15
      %s176 = smul.addr %s175, 4
      %s177 = scalar_lea.vmem %s3, %s176
      %s178 = smul.u32 8, %s14
      %p179 = scmp.lt.s32.totalorder %s178, 15
      %s180 = scalar_select %p179, %s178, 15
      %s181 = smul.addr %s180, 4
      %s182 = scalar_lea.vmem %s0, %s181
      %s183 = smul.u32 8, %s14
      %s184 = smul.u32 8, %s14
      %p185 = scmp.lt.s32.totalorder %s184, 15
      %s186 = scalar_select %p185, %s184, 15
      %s187 = smul.addr %s186, 8
      %s188 = scalar_lea.vmem %s2, %s187
      %s189 = smul.u32 8, %s14
      %s190 = smul.u32 8, %s14
      %p191 = scmp.lt.s32.totalorder %s190, 15
      %s192 = scalar_select %p191, %s190, 15
      %s193 = smul.addr %s192, 4
      %s194 = scalar_lea.vmem %s3, %s193
      %s195 = smul.u32 8, %s14
      %v197 = vld [vmem:[%s182] sm:$0xf]
      %v198 = vld [vmem:[%s182 + $0x4] sm:$0xf]
      %v199 = vld [vmem:[%s182 + $0x8] sm:$0xf]
      %v200 = vld [vmem:[%s182 + $0xc] sm:$0xf]
      %v201 = vld [vmem:[%s182 + $0x10] sm:$0xf]
      %v202 = vld [vmem:[%s182 + $0x14] sm:$0xf]
      %v203 = vld [vmem:[%s182 + $0x18] sm:$0xf]
      %v204 = vld [vmem:[%s182 + $0x1c] sm:$0xf]
      %v205 = vld [vmem:[%s1] sm:$0xf]
      %v206 = vld [vmem:[%s1 + $0x4] sm:$0xf]
      %v207 = vld [vmem:[%s1 + $0x8] sm:$0xf]
      %v208 = vld [vmem:[%s1 + $0xc] sm:$0xf]
      %v209 = vld [vmem:[%s1 + $0x10] sm:$0xf]
      %v210 = vld [vmem:[%s1 + $0x14] sm:$0xf]
      %v211 = vld [vmem:[%s1 + $0x18] sm:$0xf]
      %v212 = vld [vmem:[%s1 + $0x1c] sm:$0xf]
      %v213 = vld [vmem:[%s1 + $0x20] sm:$0xf]
      %v214 = vld [vmem:[%s1 + $0x24] sm:$0xf]
      %v215 = vld [vmem:[%s1 + $0x28] sm:$0xf]
      %v216 = vld [vmem:[%s1 + $0x2c] sm:$0xf]
      %v217 = vld [vmem:[%s1 + $0x30] sm:$0xf]
      %v218 = vld [vmem:[%s1 + $0x34] sm:$0xf]
      %v219 = vld [vmem:[%s1 + $0x38] sm:$0xf]
      %v220 = vld [vmem:[%s1 + $0x3c] sm:$0xf]
      %v229 = vunpack.c.l.b16 %v197
      %v230 = vunpack.c.l.b16 %v198
      %v231 = vunpack.c.l.b16 %v199
      %v232 = vunpack.c.l.b16 %v200
      %v233 = vunpack.c.l.b16 %v201
      %v234 = vunpack.c.l.b16 %v202
      %v235 = vunpack.c.l.b16 %v203
      %v236 = vunpack.c.l.b16 %v204
      %v237 = vpack.c.b16 %v230, %v229
      %v238 = vpack.c.b16 %v232, %v231
      %v239 = vpack.c.b16 %v234, %v233
      %v240 = vpack.c.b16 %v236, %v235
      %v261 = vunpack.c.l.b16 %v205
      %v262 = vunpack.c.l.b16 %v206
      %v263 = vunpack.c.l.b16 %v207
      %v264 = vunpack.c.l.b16 %v208
      %v265 = vunpack.c.l.b16 %v209
      %v266 = vunpack.c.l.b16 %v210
      %v267 = vunpack.c.l.b16 %v211
      %v268 = vunpack.c.l.b16 %v212
      %v269 = vunpack.c.l.b16 %v213
      %v270 = vunpack.c.l.b16 %v214
      %v271 = vunpack.c.l.b16 %v215
      %v272 = vunpack.c.l.b16 %v216
      %v273 = vunpack.c.l.b16 %v217
      %v274 = vunpack.c.l.b16 %v218
      %v275 = vunpack.c.l.b16 %v219
      %v276 = vunpack.c.l.b16 %v220
      %v277 = vpack.c.b16 %v262, %v261
      %v278 = vpack.c.b16 %v264, %v263
      %v279 = vpack.c.b16 %v266, %v265
      %v280 = vpack.c.b16 %v268, %v267
      %v281 = vpack.c.b16 %v270, %v269
      %v282 = vpack.c.b16 %v272, %v271
      %v283 = vpack.c.b16 %v274, %v273
      %v284 = vpack.c.b16 %v276, %v275
      %293 = vmatprep.subr.bf16.mxu0 0
      %294 = vmatpush1.bf16.msra.mxu0 %v277
      %295 = vmatprep.subr.bf16.mxu0 0
      %296 = vmatpush1.bf16.msra.mxu0 %v278
      %297 = vmatprep.subr.bf16.mxu0 0
      %298 = vmatpush1.bf16.msra.mxu0 %v279
      %299 = vmatprep.subr.bf16.mxu0 0
      %300 = vmatpush1.bf16.msra.mxu0 %v280
      %301 = vmatprep.subr.bf16.mxu0 0
      %302 = vmatpush1.bf16.msra.mxu0 %v281
      %303 = vmatprep.subr.bf16.mxu0 0
      %304 = vmatpush1.bf16.msra.mxu0 %v282
      %305 = vmatprep.subr.bf16.mxu0 0
      %306 = vmatpush1.bf16.msra.mxu0 %v283
      %307 = vmatprep.subr.bf16.mxu0 0
      %308 = vmatpush1.bf16.msra.mxu0 %v284
      %309 = vmatprep.subr.bf16.mxu0 0
      %310 = vmatpush1.bf16.msra.mxu0 0
      %311 = vmatprep.subr.bf16.mxu0 0
      %312 = vmatpush1.bf16.msra.mxu0 0
      %313 = vmatprep.subr.bf16.mxu0 0
      %314 = vmatpush1.bf16.msra.mxu0 0
      %315 = vmatprep.subr.bf16.mxu0 0
      %316 = vmatpush1.bf16.msra.mxu0 0
      %317 = vmatprep.subr.bf16.mxu0 0
      %318 = vmatpush1.bf16.msra.mxu0 0
      %319 = vmatprep.subr.bf16.mxu0 0
      %320 = vmatpush1.bf16.msra.mxu0 0
      %321 = vmatprep.subr.bf16.mxu0 0
      %322 = vmatpush1.bf16.msra.mxu0 0
      %323 = vmatprep.subr.bf16.mxu0 0
      %324 = vmatpush1.bf16.msra.mxu0 0
      %325 = vmatprep.mubr.bf16.mxu0 0
      %326 = vmatmul.mubr.bf16.gmra.mrb[0].mxu0 %v237
      %v327 = vpop.f32.mrb[0].mxu0
      %v328 = vadd.f32 0.0, %v327
      %v329 = vpop.f32.mrb[0].mxu0
      %v330 = vpop.f32.mrb[0].mxu0
      %v331 = vadd.f32 0.0, %v330
      %v332 = vpop.f32.mrb[0].mxu0
      %333 = vmatprep.mubr.bf16.mxu0 0
      %334 = vmatmul.mubr.bf16.gmra.mrb[0].mxu0 %v238
      %v335 = vpop.f32.mrb[0].mxu0
      %v336 = vadd.f32 0.0, %v335
      %v337 = vpop.f32.mrb[0].mxu0
      %v338 = vpop.f32.mrb[0].mxu0
      %v339 = vadd.f32 0.0, %v338
      %v340 = vpop.f32.mrb[0].mxu0
      %341 = vmatprep.mubr.bf16.mxu0 0
      %342 = vmatmul.mubr.bf16.gmra.mrb[0].mxu0 %v239
      %v343 = vpop.f32.mrb[0].mxu0
      %v344 = vadd.f32 0.0, %v343
      %v345 = vpop.f32.mrb[0].mxu0
      %v346 = vpop.f32.mrb[0].mxu0
      %v347 = vadd.f32 0.0, %v346
      %v348 = vpop.f32.mrb[0].mxu0
      %349 = vmatprep.mubr.bf16.mxu0 0
      %350 = vmatmul.mubr.bf16.gmra.mrb[0].mxu0 %v240
      %v351 = vpop.f32.mrb[0].mxu0
      %v352 = vadd.f32 0.0, %v351
      %v353 = vpop.f32.mrb[0].mxu0
      %v354 = vpop.f32.mrb[0].mxu0
      %v355 = vadd.f32 0.0, %v354
      %v356 = vpop.f32.mrb[0].mxu0
      %357 = vdwg.mxu0
      %v358 = vld [vmem:[%s188] sm:$0xff]
      %v359 = vld [vmem:[%s188 + $0x8] sm:$0xff]
      %v360 = vld [vmem:[%s188 + $0x10] sm:$0xff]
      %v361 = vld [vmem:[%s188 + $0x18] sm:$0xff]
      %v362 = vld [vmem:[%s188 + $0x20] sm:$0xff]
      %v363 = vld [vmem:[%s188 + $0x28] sm:$0xff]
      %v364 = vld [vmem:[%s188 + $0x30] sm:$0xff]
      %v365 = vld [vmem:[%s188 + $0x38] sm:$0xff]
      %367 = vset.pattern.permute.xlu0 0
      %368 = vperm.xlu0 %367, %v358
      %v369 = vpop.permute.xlu0 %368
      %372 = vset.pattern.permute.xlu0 0
      %373 = vperm.xlu0 %372, %v359
      %v374 = vpop.permute.xlu0 %373
      %377 = vset.pattern.permute.xlu0 0
      %378 = vperm.xlu0 %377, %v360
      %v379 = vpop.permute.xlu0 %378
      %382 = vset.pattern.permute.xlu0 0
      %383 = vperm.xlu0 %382, %v361
      %v384 = vpop.permute.xlu0 %383
      %387 = vset.pattern.permute.xlu0 0
      %388 = vperm.xlu0 %387, %v362
      %v389 = vpop.permute.xlu0 %388
      %392 = vset.pattern.permute.xlu0 0
      %393 = vperm.xlu0 %392, %v363
      %v394 = vpop.permute.xlu0 %393
      %397 = vset.pattern.permute.xlu0 0
      %398 = vperm.xlu0 %397, %v364
      %v399 = vpop.permute.xlu0 %398
      %402 = vset.pattern.permute.xlu0 0
      %403 = vperm.xlu0 %402, %v365
      %v404 = vpop.permute.xlu0 %403
      %v406 = vmul.f32 %v328, %v369
      %v407 = vmul.f32 %v331, %v374
      %v408 = vmul.f32 %v336, %v379
      %v409 = vmul.f32 %v339, %v384
      %v410 = vmul.f32 %v344, %v389
      %v411 = vmul.f32 %v347, %v394
      %v412 = vmul.f32 %v352, %v399
      %v413 = vmul.f32 %v355, %v404
      %v414 = vpack.c.bf16 %v407, %v406
      %v415 = vpack.c.bf16 %v409, %v408
      %v416 = vpack.c.bf16 %v411, %v410
      %v417 = vpack.c.bf16 %v413, %v412
      %v422 = vunpack.c.l.b16 %v414
      %v423 = vunpack.c.h.b16 %v414
      %v424 = vunpack.c.l.b16 %v415
      %v425 = vunpack.c.h.b16 %v415
      %v426 = vunpack.c.l.b16 %v416
      %v427 = vunpack.c.h.b16 %v416
      %v428 = vunpack.c.l.b16 %v417
      %v429 = vunpack.c.h.b16 %v417
      %v430 = vpack.c.b16 %v422, %v422
      %v431 = vpack.c.b16 %v423, %v423
      %v432 = vpack.c.b16 %v424, %v424
      %v433 = vpack.c.b16 %v425, %v425
      %v434 = vpack.c.b16 %v426, %v426
      %v435 = vpack.c.b16 %v427, %v427
      %v436 = vpack.c.b16 %v428, %v428
      %v437 = vpack.c.b16 %v429, %v429
      %446 = vst [vmem:[%s194] sm:$0xf] %v430
      %447 = vst [vmem:[%s194 + $0x4] sm:$0xf] %v431
      %448 = vst [vmem:[%s194 + $0x8] sm:$0xf] %v432
      %449 = vst [vmem:[%s194 + $0xc] sm:$0xf] %v433
      %450 = vst [vmem:[%s194 + $0x10] sm:$0xf] %v434
      %451 = vst [vmem:[%s194 + $0x14] sm:$0xf] %v435
      %452 = vst [vmem:[%s194 + $0x18] sm:$0xf] %v436
      %453 = vst [vmem:[%s194 + $0x1c] sm:$0xf] %v437
      %s454 = smul.u32 8, %s14
      %p455 = scmp.lt.s32.totalorder %s454, 15
      %s456 = scalar_select %p455, %s454, 15
      %s457 = smul.addr %s456, 4
      %s458 = scalar_lea.vmem %s3, %s457
      // Predicated region
      $region33: #{gnn_forward.4} parent=31 // pred_check
        %p459 = pneg %p105
      $region34: #{gnn_forward.4} parent=31 // pred_check_branch
        %461 = sbr.rel (%p459) target = $region36
      $region35: #{gnn_forward.4} parent=31 // pred_region
        %s462 = smul.u32 8, %s14
      $region36: #{gnn_forward.4} parent=31 // pred_fallthru
        _
    $region32: #{gnn_forward.4} parent=5 // pred_fallthru
      _
    %p463 = scmp.le.s32.totalorder 2, %s9
    // Predicated region
    $region37: #{gnn_forward.4} parent=5 // pred_check
      %p464 = pneg %p463
    $region38: #{gnn_forward.4} parent=5 // pred_check_branch
      %466 = sbr.rel (%p464) target = $region40
    $region39: #{gnn_forward.4} parent=5 // pred_region
      %s467 = ssub.s32 %s9, 2
      // Predicated region
      $region41: #{gnn_forward.4} parent=39 // pred_check
        %p468 = pneg %p111
      $region42: #{gnn_forward.4} parent=39 // pred_check_branch
        %470 = sbr.rel (%p468) target = $region44
      $region43: #{gnn_forward.4} parent=39 // pred_region
        %s471 = smul.u32 8, %s15
        %p472 = scmp.lt.s32.totalorder %s471, 15
        %s473 = scalar_select %p472, %s471, 15
        %s474 = smul.addr %s473, 4
        %s475 = scalar_lea.vmem %s3, %s474
      $region44: #{gnn_forward.4} parent=39 // pred_fallthru
        _
    $region40: #{gnn_forward.4} parent=5 // pred_fallthru
      _
  $region6: #{gnn_forward.4} parent=0 // loop_footer
    %s13 = sadd.s32 1, %s9
  $region7: #{gnn_forward.4} parent=0 // loop_footer_branch
    %8 = sbr.rel target = $region3
  $region8: #{gnn_forward.4} parent=0 // loop_exit
    _

// kernel: gnn_forward.7
$region0: #{gnn_forward.7}
  #allocation0 [shape = 'u32[]', space=smem, size = 0x4, offset = 0x4, fixed_abs, tag = 'smem constant byte address 0x4 - core index']
  #allocation1 [shape = 'u32[144,128]{1,0:T(1,128)}', space=vmem, size = 0x12000, scoped, tag = 'internal scratch']
  #allocation2 [shape = 'f32[64,128]{1,0:T(8,128)}', space=vmem, size = 0x8000, scoped, tag = 'scratch operand']
  %s0 = inlined_call_operand.vmem [shape: bf16[128,128], index: 0, kind: input, shape index: {}]
  %s1 = inlined_call_operand.vmem [shape: bf16[128,128], index: 1, kind: input, shape index: {}]
  %s2 = inlined_call_operand.vmem [shape: f32[128,1], index: 2, kind: input, shape index: {}]
  %s3 = inlined_call_operand.vmem [shape: f32[1,128], index: 3, kind: input, shape index: {}]
  %s4 = inlined_call_operand.vmem [shape: f32[128,128], index: 4, kind: output, shape index: {}]
  %s5 = sld [smem:[#allocation0]]
  $region57: #{gnn_forward.7} parent=0
    _
  %s7 = ssub.s32 1, %s5
  %s8 = scalar_select 0, %s7, %s5
  loop: start=0, step=1, limit=4
  $region2: #{gnn_forward.7} parent=0 // loop_pre_header
    _
  $region3: #{gnn_forward.7} parent=0 // loop_header
    %s10 = sphi 0, %s14
    %p11 = scmp.ge.s32.totalorder %s10, 4
    %s17 = sphi 0, %s29
    %s18 = sphi 0, %s25
    %s19 = sphi 0, %s17
    %s20 = sphi 0, %s18
    %s21 = sphi 0, %s19
    %s22 = sphi 0, %s20
    %s34 = sphi 0, %s36
    %s37 = sphi 0, %s34
    %s38 = sphi 0, %s37
    %s54 = sphi 0, %s38
    %s58 = sphi 0, %s58
    %s60 = sphi 0, %s58
    %s61 = sphi 0, %s60
    %s75 = sphi 0, %s61
    %s81 = sphi 0, %s83
    %s84 = sphi 0, %s81
    %s85 = sphi 0, %s84
    %s101 = sphi 0, %s85
    %s105 = sphi 0, %s105
    %s107 = sphi 0, %s105
    %s108 = sphi 0, %s107
    %s122 = sphi 0, %s108
    %s128 = sphi 0, %s130
    %s131 = sphi 0, %s128
    %s132 = sphi 0, %s131
    %s148 = sphi 0, %s132
  $region4: #{gnn_forward.7} parent=0 // loop_header_branch
    %13 = sbr.rel (%p11) target = $region8
  $region5: #{gnn_forward.7} parent=0 // loop_body
    %s15 = ssub.s32 %s10, 1
    %s16 = ssub.s32 %s10, 2
    %s23 = sadd.s32 1, %s18
    %p24 = scmp.ge.s32.totalorder %s23, 1
    %s25 = scalar_select %p24, 0, %s23
    %s26 = sadd.s32 1, %s17
    %s27 = scalar_select %p24, %s26, %s17
    %p28 = scmp.ge.s32.totalorder %s27, 2
    %s29 = scalar_select %p28, 0, %s27
    %s30 = ssub.s32 %s17, %s29
    %s31 = ssub.s32 %s18, %s25
    %s32 = sor.u32 %s30, %s31
    %p33 = scmp.eq.s32.totalorder %s32, 0
    %s35 = sadd.s32 %s34, 1
    %s36 = scalar_select %p33, %s34, %s35
    %p39 = pneg %p33
    %p40 = scmp.eq.s32.totalorder %s10, 1
    %p41 = por %p39, %p40
    %p42 = scmp.ne.s32.totalorder %s34, %s37
    %p43 = scmp.eq.s32.totalorder %s10, 0
    %p44 = por %p42, %p43
    %p45 = scmp.ne.s32.totalorder %s34, %s37
    %p46 = scmp.eq.s32.totalorder %s15, 1
    %p47 = por %p45, %p46
    %p48 = scmp.ne.s32.totalorder %s37, %s38
    %p49 = scmp.eq.s32.totalorder %s15, 0
    %p50 = por %p48, %p49
    %p51 = scmp.ne.s32.totalorder %s37, %s38
    %p52 = scmp.eq.s32.totalorder %s16, 1
    %p53 = por %p51, %p52
    %p55 = scmp.ne.s32.totalorder %s38, %s54
    %p56 = scmp.eq.s32.totalorder %s16, 0
    %p57 = por %p55, %p56
    %s59 = sadd.s32 %s58, 1
    %p62 = scmp.eq.s32.totalorder %s10, 1
    %p63 = scmp.ne.s32.totalorder %s58, %s60
    %p64 = scmp.eq.s32.totalorder %s10, 0
    %p65 = por %p63, %p64
    %p66 = scmp.ne.s32.totalorder %s58, %s60
    %p67 = scmp.eq.s32.totalorder %s15, 1
    %p68 = por %p66, %p67
    %p69 = scmp.ne.s32.totalorder %s60, %s61
    %p70 = scmp.eq.s32.totalorder %s15, 0
    %p71 = por %p69, %p70
    %p72 = scmp.ne.s32.totalorder %s60, %s61
    %p73 = scmp.eq.s32.totalorder %s16, 1
    %p74 = por %p72, %p73
    %p76 = scmp.ne.s32.totalorder %s61, %s75
    %p77 = scmp.eq.s32.totalorder %s16, 0
    %p78 = por %p76, %p77
    %s79 = ssub.s32 %s17, %s29
    %p80 = scmp.eq.s32.totalorder %s79, 0
    %s82 = sadd.s32 %s81, 1
    %s83 = scalar_select %p80, %s81, %s82
    %p86 = pneg %p80
    %p87 = scmp.eq.s32.totalorder %s10, 1
    %p88 = por %p86, %p87
    %p89 = scmp.ne.s32.totalorder %s81, %s84
    %p90 = scmp.eq.s32.totalorder %s10, 0
    %p91 = por %p89, %p90
    %p92 = scmp.ne.s32.totalorder %s81, %s84
    %p93 = scmp.eq.s32.totalorder %s15, 1
    %p94 = por %p92, %p93
    %p95 = scmp.ne.s32.totalorder %s84, %s85
    %p96 = scmp.eq.s32.totalorder %s15, 0
    %p97 = por %p95, %p96
    %p98 = scmp.ne.s32.totalorder %s84, %s85
    %p99 = scmp.eq.s32.totalorder %s16, 1
    %p100 = por %p98, %p99
    %p102 = scmp.ne.s32.totalorder %s85, %s101
    %p103 = scmp.eq.s32.totalorder %s16, 0
    %p104 = por %p102, %p103
    %s106 = sadd.s32 %s105, 1
    %p109 = scmp.eq.s32.totalorder %s10, 1
    %p110 = scmp.ne.s32.totalorder %s105, %s107
    %p111 = scmp.eq.s32.totalorder %s10, 0
    %p112 = por %p110, %p111
    %p113 = scmp.ne.s32.totalorder %s105, %s107
    %p114 = scmp.eq.s32.totalorder %s15, 1
    %p115 = por %p113, %p114
    %p116 = scmp.ne.s32.totalorder %s107, %s108
    %p117 = scmp.eq.s32.totalorder %s15, 0
    %p118 = por %p116, %p117
    %p119 = scmp.ne.s32.totalorder %s107, %s108
    %p120 = scmp.eq.s32.totalorder %s16, 1
    %p121 = por %p119, %p120
    %p123 = scmp.ne.s32.totalorder %s108, %s122
    %p124 = scmp.eq.s32.totalorder %s16, 0
    %p125 = por %p123, %p124
    %s126 = ssub.s32 %s17, %s29
    %p127 = scmp.eq.s32.totalorder %s126, 0
    %s129 = sadd.s32 %s128, 1
    %s130 = scalar_select %p127, %s128, %s129
    %p133 = pneg %p127
    %p134 = scmp.eq.s32.totalorder %s10, 1
    %p135 = por %p133, %p134
    %p136 = scmp.ne.s32.totalorder %s128, %s131
    %p137 = scmp.eq.s32.totalorder %s10, 0
    %p138 = por %p136, %p137
    %p139 = scmp.ne.s32.totalorder %s128, %s131
    %p140 = scmp.eq.s32.totalorder %s15, 1
    %p141 = por %p139, %p140
    %p142 = scmp.ne.s32.totalorder %s131, %s132
    %p143 = scmp.eq.s32.totalorder %s15, 0
    %p144 = por %p142, %p143
    %p145 = scmp.ne.s32.totalorder %s131, %s132
    %p146 = scmp.eq.s32.totalorder %s16, 1
    %p147 = por %p145, %p146
    %p149 = scmp.ne.s32.totalorder %s132, %s148
    %p150 = scmp.eq.s32.totalorder %s16, 0
    %p151 = por %p149, %p150
    %p152 = scmp.le.s32.totalorder 1, %s10
    %p153 = scmp.lt.s32.totalorder %s10, 3
    %p154 = pnand %p152, %p153
    %p155 = pneg %p154
    // Predicated region
    $region9: #{gnn_forward.7} parent=5 // pred_check
      _
    $region10: #{gnn_forward.7} parent=5 // pred_check_branch
      %157 = sbr.rel (%p154) target = $region12
    $region11: #{gnn_forward.7} parent=5 // pred_region
      %s158 = ssub.s32 %s10, 1
      // Predicated region
      $region13: #{gnn_forward.7} parent=11 // pred_check
        %p159 = pneg %p71
      $region14: #{gnn_forward.7} parent=11 // pred_check_branch
        %161 = sbr.rel (%p159) target = $region16
      $region15: #{gnn_forward.7} parent=11 // pred_region
        _
      $region16: #{gnn_forward.7} parent=11 // pred_fallthru
        _
      // Predicated region
      $region17: #{gnn_forward.7} parent=11 // pred_check
        %p162 = pneg %p118
      $region18: #{gnn_forward.7} parent=11 // pred_check_branch
        %164 = sbr.rel (%p162) target = $region20
      $region19: #{gnn_forward.7} parent=11 // pred_region
        _
      $region20: #{gnn_forward.7} parent=11 // pred_fallthru
        _
    $region12: #{gnn_forward.7} parent=5 // pred_fallthru
      _
    %p165 = scmp.lt.s32.totalorder %s10, 2
    // Predicated region
    $region21: #{gnn_forward.7} parent=5 // pred_check
      %p166 = pneg %p165
    $region22: #{gnn_forward.7} parent=5 // pred_check_branch
      %168 = sbr.rel (%p166) target = $region24
    $region23: #{gnn_forward.7} parent=5 // pred_region
      // Predicated region
      $region25: #{gnn_forward.7} parent=23 // pred_check
        %p169 = pneg %p44
      $region26: #{gnn_forward.7} parent=23 // pred_check_branch
        %171 = sbr.rel (%p169) target = $region28
      $region27: #{gnn_forward.7} parent=23 // pred_region
        %s172 = smul.u32 8, %s17
        %p173 = scmp.lt.s32.totalorder %s172, 15
        %s174 = scalar_select %p173, %s172, 15
        %p175 = scmp.lt.s32.totalorder %s18, 0
        %s176 = scalar_select %p175, %s18, 0
        %s177 = sadd.s32 %s176, %s174
        %s178 = smul.addr %s177, 4
        %s179 = scalar_lea.vmem %s0, %s178
        %s180 = smul.u32 8, %s17
      $region28: #{gnn_forward.7} parent=23 // pred_fallthru
        _
      // Predicated region
      $region29: #{gnn_forward.7} parent=23 // pred_check
        %p181 = pneg %p91
      $region30: #{gnn_forward.7} parent=23 // pred_check_branch
        %183 = sbr.rel (%p181) target = $region32
      $region31: #{gnn_forward.7} parent=23 // pred_region
        %s184 = smul.u32 8, %s17
        %p185 = scmp.lt.s32.totalorder %s184, 15
        %s186 = scalar_select %p185, %s184, 15
        %s187 = smul.addr %s186, 8
        %s188 = scalar_lea.vmem %s2, %s187
        %s189 = smul.u32 8, %s17
      $region32: #{gnn_forward.7} parent=23 // pred_fallthru
        _
    $region24: #{gnn_forward.7} parent=5 // pred_fallthru
      _
    %p190 = scmp.le.s32.totalorder 1, %s10
    %p191 = scmp.lt.s32.totalorder %s10, 3
    %p192 = pnand %p190, %p191
    %p193 = pneg %p192
    // Predicated region
    $region33: #{gnn_forward.7} parent=5 // pred_check
      _
    $region34: #{gnn_forward.7} parent=5 // pred_check_branch
      %195 = sbr.rel (%p192) target = $region36
    $region35: #{gnn_forward.7} parent=5 // pred_region
      %s196 = ssub.s32 %s10, 1
      %s197 = smul.u32 8, %s19
      %p198 = scmp.lt.s32.totalorder %s197, 15
      %s199 = scalar_select %p198, %s197, 15
      %p200 = scmp.lt.s32.totalorder %s20, 0
      %s201 = scalar_select %p200, %s20, 0
      %s202 = sadd.s32 %s201, %s199
      %s203 = smul.addr %s202, 4
      %s204 = scalar_lea.vmem %s0, %s203
      %p205 = pneg %p50
      %p206 = pneg %p47
      %p207 = pneg %p71
      %p208 = pneg %p68
      %s209 = smul.u32 8, %s19
      %p210 = scmp.lt.s32.totalorder %s209, 15
      %s211 = scalar_select %p210, %s209, 15
      %s212 = smul.addr %s211, 8
      %s213 = scalar_lea.vmem %s2, %s212
      %p214 = pneg %p97
      %p215 = pneg %p94
      %p216 = pneg %p118
      %p217 = pneg %p115
      %p218 = pneg %p144
      %p219 = pneg %p141
      %s220 = smul.u32 8, %s19
      %p221 = scmp.lt.s32.totalorder %s220, 15
      %s222 = scalar_select %p221, %s220, 15
      %s223 = smul.addr %s222, 8
      %s224 = scalar_lea.vmem %s4, %s223
      %s225 = smul.u32 8, %s19
      %p226 = scmp.lt.s32.totalorder %s225, 15
      %s227 = scalar_select %p226, %s225, 15
      %p228 = scmp.lt.s32.totalorder %s20, 0
      %s229 = scalar_select %p228, %s20, 0
      %s230 = sadd.s32 %s229, %s227
      %s231 = smul.addr %s230, 4
      %s232 = scalar_lea.vmem %s0, %s231
      %s233 = smul.u32 8, %s19
      %s234 = smul.u32 8, %s19
      %p235 = scmp.lt.s32.totalorder %s234, 15
      %s236 = scalar_select %p235, %s234, 15
      %s237 = smul.addr %s236, 8
      %s238 = scalar_lea.vmem %s2, %s237
      %s239 = smul.u32 8, %s19
      %s240 = smul.u32 8, %s19
      %p241 = scmp.lt.s32.totalorder %s240, 15
      %s242 = scalar_select %p241, %s240, 15
      %s243 = smul.addr %s242, 8
      %s244 = scalar_lea.vmem %s4, %s243
      %s245 = smul.u32 8, %s19
      %p247 = scmp.eq.s32.totalorder %s20, 0
      // Predicated region
      $region37: #{gnn_forward.7} parent=35 // pred_check
        %p248 = pneg %p247
      $region38: #{gnn_forward.7} parent=35 // pred_check_branch
        %250 = sbr.rel (%p248) target = $region40
      $region39: #{gnn_forward.7} parent=35 // pred_region
        %251 = vst [vmem:[#allocation2] sm:$0xff] 0.0
        %252 = vst [vmem:[#allocation2 + $0x8] sm:$0xff] 0.0
        %253 = vst [vmem:[#allocation2 + $0x10] sm:$0xff] 0.0
        %254 = vst [vmem:[#allocation2 + $0x18] sm:$0xff] 0.0
        %255 = vst [vmem:[#allocation2 + $0x20] sm:$0xff] 0.0
        %256 = vst [vmem:[#allocation2 + $0x28] sm:$0xff] 0.0
        %257 = vst [vmem:[#allocation2 + $0x30] sm:$0xff] 0.0
        %258 = vst [vmem:[#allocation2 + $0x38] sm:$0xff] 0.0
      $region40: #{gnn_forward.7} parent=35 // pred_fallthru
        _
      %s259 = smul.u32 %s20, 128
      %s260 = sshra.s32 %s259, 3
      %s261 = sand.u32 %s259, 7
      %s262 = smul.addr %s260, 4
      %s263 = scalar_lea.vmem %s1, %s262
      %v264 = vld [vmem:[%s263] sm:$0xf]
      %v265 = vld [vmem:[%s263 + $0x4] sm:$0xf]
      %v266 = vld [vmem:[%s263 + $0x8] sm:$0xf]
      %v267 = vld [vmem:[%s263 + $0xc] sm:$0xf]
      %v268 = vld [vmem:[%s263 + $0x10] sm:$0xf]
      %v269 = vld [vmem:[%s263 + $0x14] sm:$0xf]
      %v270 = vld [vmem:[%s263 + $0x18] sm:$0xf]
      %v271 = vld [vmem:[%s263 + $0x1c] sm:$0xf]
      %v272 = vld [vmem:[%s263 + $0x20] sm:$0xf]
      %v273 = vld [vmem:[%s263 + $0x24] sm:$0xf]
      %v274 = vld [vmem:[%s263 + $0x28] sm:$0xf]
      %v275 = vld [vmem:[%s263 + $0x2c] sm:$0xf]
      %v276 = vld [vmem:[%s263 + $0x30] sm:$0xf]
      %v277 = vld [vmem:[%s263 + $0x34] sm:$0xf]
      %v278 = vld [vmem:[%s263 + $0x38] sm:$0xf]
      %v279 = vld [vmem:[%s263 + $0x3c] sm:$0xf]
      %v280 = vld [vmem:[#allocation2] sm:$0xff]
      %v281 = vld [vmem:[#allocation2 + $0x8] sm:$0xff]
      %v282 = vld [vmem:[#allocation2 + $0x10] sm:$0xff]
      %v283 = vld [vmem:[#allocation2 + $0x18] sm:$0xff]
      %v284 = vld [vmem:[#allocation2 + $0x20] sm:$0xff]
      %v285 = vld [vmem:[#allocation2 + $0x28] sm:$0xff]
      %v286 = vld [vmem:[#allocation2 + $0x30] sm:$0xff]
      %v287 = vld [vmem:[#allocation2 + $0x38] sm:$0xff]
      %v288 = vld [vmem:[%s232] sm:$0xf]
      %v289 = vld [vmem:[%s232 + $0x4] sm:$0xf]
      %v290 = vld [vmem:[%s232 + $0x8] sm:$0xf]
      %v291 = vld [vmem:[%s232 + $0xc] sm:$0xf]
      %v292 = vld [vmem:[%s232 + $0x10] sm:$0xf]
      %v293 = vld [vmem:[%s232 + $0x14] sm:$0xf]
      %v294 = vld [vmem:[%s232 + $0x18] sm:$0xf]
      %v295 = vld [vmem:[%s232 + $0x1c] sm:$0xf]
      %v304 = vunpack.c.l.b16 %v288
      %v305 = vunpack.c.l.b16 %v289
      %v306 = vunpack.c.l.b16 %v290
      %v307 = vunpack.c.l.b16 %v291
      %v308 = vunpack.c.l.b16 %v292
      %v309 = vunpack.c.l.b16 %v293
      %v310 = vunpack.c.l.b16 %v294
      %v311 = vunpack.c.l.b16 %v295
      %v312 = vpack.c.b16 %v305, %v304
      %v313 = vpack.c.b16 %v307, %v306
      %v314 = vpack.c.b16 %v309, %v308
      %v315 = vpack.c.b16 %v311, %v310
      %v336 = vunpack.c.l.b16 %v264
      %v337 = vunpack.c.l.b16 %v265
      %v338 = vunpack.c.l.b16 %v266
      %v339 = vunpack.c.l.b16 %v267
      %v340 = vunpack.c.l.b16 %v268
      %v341 = vunpack.c.l.b16 %v269
      %v342 = vunpack.c.l.b16 %v270
      %v343 = vunpack.c.l.b16 %v271
      %v344 = vunpack.c.l.b16 %v272
      %v345 = vunpack.c.l.b16 %v273
      %v346 = vunpack.c.l.b16 %v274
      %v347 = vunpack.c.l.b16 %v275
      %v348 = vunpack.c.l.b16 %v276
      %v349 = vunpack.c.l.b16 %v277
      %v350 = vunpack.c.l.b16 %v278
      %v351 = vunpack.c.l.b16 %v279
      %v352 = vpack.c.b16 %v337, %v336
      %v353 = vpack.c.b16 %v339, %v338
      %v354 = vpack.c.b16 %v341, %v340
      %v355 = vpack.c.b16 %v343, %v342
      %v356 = vpack.c.b16 %v345, %v344
      %v357 = vpack.c.b16 %v347, %v346
      %v358 = vpack.c.b16 %v349, %v348
      %v359 = vpack.c.b16 %v351, %v350
      %368 = vmatprep.subr.bf16.mxu0 0
      %369 = vmatpush1.bf16.msra.mxu0 %v352
      %370 = vmatprep.subr.bf16.mxu0 0
      %371 = vmatpush1.bf16.msra.mxu0 %v353
      %372 = vmatprep.subr.bf16.mxu0 0
      %373 = vmatpush1.bf16.msra.mxu0 %v354
      %374 = vmatprep.subr.bf16.mxu0 0
      %375 = vmatpush1.bf16.msra.mxu0 %v355
      %376 = vmatprep.subr.bf16.mxu0 0
      %377 = vmatpush1.bf16.msra.mxu0 %v356
      %378 = vmatprep.subr.bf16.mxu0 0
      %379 = vmatpush1.bf16.msra.mxu0 %v357
      %380 = vmatprep.subr.bf16.mxu0 0
      %381 = vmatpush1.bf16.msra.mxu0 %v358
      %382 = vmatprep.subr.bf16.mxu0 0
      %383 = vmatpush1.bf16.msra.mxu0 %v359
      %384 = vmatprep.subr.bf16.mxu0 0
      %385 = vmatpush1.bf16.msra.mxu0 0
      %386 = vmatprep.subr.bf16.mxu0 0
      %387 = vmatpush1.bf16.msra.mxu0 0
      %388 = vmatprep.subr.bf16.mxu0 0
      %389 = vmatpush1.bf16.msra.mxu0 0
      %390 = vmatprep.subr.bf16.mxu0 0
      %391 = vmatpush1.bf16.msra.mxu0 0
      %392 = vmatprep.subr.bf16.mxu0 0
      %393 = vmatpush1.bf16.msra.mxu0 0
      %394 = vmatprep.subr.bf16.mxu0 0
      %395 = vmatpush1.bf16.msra.mxu0 0
      %396 = vmatprep.subr.bf16.mxu0 0
      %397 = vmatpush1.bf16.msra.mxu0 0
      %398 = vmatprep.subr.bf16.mxu0 0
      %399 = vmatpush1.bf16.msra.mxu0 0
      %400 = vmatprep.mubr.bf16.mxu0 0
      %401 = vmatmul.mubr.bf16.gmra.mrb[0].mxu0 %v312
      %v402 = vpop.f32.mrb[0].mxu0
      %v403 = vadd.f32 0.0, %v402
      %v404 = vpop.f32.mrb[0].mxu0
      %v405 = vpop.f32.mrb[0].mxu0
      %v406 = vadd.f32 0.0, %v405
      %v407 = vpop.f32.mrb[0].mxu0
      %408 = vmatprep.mubr.bf16.mxu0 0
      %409 = vmatmul.mubr.bf16.gmra.mrb[0].mxu0 %v313
      %v410 = vpop.f32.mrb[0].mxu0
      %v411 = vadd.f32 0.0, %v410
      %v412 = vpop.f32.mrb[0].mxu0
      %v413 = vpop.f32.mrb[0].mxu0
      %v414 = vadd.f32 0.0, %v413
      %v415 = vpop.f32.mrb[0].mxu0
      %416 = vmatprep.mubr.bf16.mxu0 0
      %417 = vmatmul.mubr.bf16.gmra.mrb[0].mxu0 %v314
      %v418 = vpop.f32.mrb[0].mxu0
      %v419 = vadd.f32 0.0, %v418
      %v420 = vpop.f32.mrb[0].mxu0
      %v421 = vpop.f32.mrb[0].mxu0
      %v422 = vadd.f32 0.0, %v421
      %v423 = vpop.f32.mrb[0].mxu0
      %424 = vmatprep.mubr.bf16.mxu0 0
      %425 = vmatmul.mubr.bf16.gmra.mrb[0].mxu0 %v315
      %v426 = vpop.f32.mrb[0].mxu0
      %v427 = vadd.f32 0.0, %v426
      %v428 = vpop.f32.mrb[0].mxu0
      %v429 = vpop.f32.mrb[0].mxu0
      %v430 = vadd.f32 0.0, %v429
      %v431 = vpop.f32.mrb[0].mxu0
      %432 = vdwg.mxu0
      %v433 = vadd.f32 %v280, %v403
      %v434 = vadd.f32 %v281, %v406
      %v435 = vadd.f32 %v282, %v411
      %v436 = vadd.f32 %v283, %v414
      %v437 = vadd.f32 %v284, %v419
      %v438 = vadd.f32 %v285, %v422
      %v439 = vadd.f32 %v286, %v427
      %v440 = vadd.f32 %v287, %v430
      %441 = vst [vmem:[#allocation2] sm:$0xff] %v433
      %442 = vst [vmem:[#allocation2 + $0x8] sm:$0xff] %v434
      %443 = vst [vmem:[#allocation2 + $0x10] sm:$0xff] %v435
      %444 = vst [vmem:[#allocation2 + $0x18] sm:$0xff] %v436
      %445 = vst [vmem:[#allocation2 + $0x20] sm:$0xff] %v437
      %446 = vst [vmem:[#allocation2 + $0x28] sm:$0xff] %v438
      %447 = vst [vmem:[#allocation2 + $0x30] sm:$0xff] %v439
      %448 = vst [vmem:[#allocation2 + $0x38] sm:$0xff] %v440
      // Predicated region
      $region41: #{gnn_forward.7} parent=35 // pred_check
        %p449 = pneg %p247
      $region42: #{gnn_forward.7} parent=35 // pred_check_branch
        %451 = sbr.rel (%p449) target = $region44
      $region43: #{gnn_forward.7} parent=35 // pred_region
        %v452 = vld [vmem:[#allocation2] sm:$0xff]
        %v453 = vld [vmem:[#allocation2 + $0x8] sm:$0xff]
        %v454 = vld [vmem:[#allocation2 + $0x10] sm:$0xff]
        %v455 = vld [vmem:[#allocation2 + $0x18] sm:$0xff]
        %v456 = vld [vmem:[#allocation2 + $0x20] sm:$0xff]
        %v457 = vld [vmem:[#allocation2 + $0x28] sm:$0xff]
        %v458 = vld [vmem:[#allocation2 + $0x30] sm:$0xff]
        %v459 = vld [vmem:[#allocation2 + $0x38] sm:$0xff]
        %v460 = vld [vmem:[%s238] sm:$0xff]
        %v461 = vld [vmem:[%s238 + $0x8] sm:$0xff]
        %v462 = vld [vmem:[%s238 + $0x10] sm:$0xff]
        %v463 = vld [vmem:[%s238 + $0x18] sm:$0xff]
        %v464 = vld [vmem:[%s238 + $0x20] sm:$0xff]
        %v465 = vld [vmem:[%s238 + $0x28] sm:$0xff]
        %v466 = vld [vmem:[%s238 + $0x30] sm:$0xff]
        %v467 = vld [vmem:[%s238 + $0x38] sm:$0xff]
        %469 = vset.pattern.permute.xlu0 0
        %470 = vperm.xlu0 %469, %v460
        %v471 = vpop.permute.xlu0 %470
        %474 = vset.pattern.permute.xlu0 0
        %475 = vperm.xlu0 %474, %v461
        %v476 = vpop.permute.xlu0 %475
        %479 = vset.pattern.permute.xlu0 0
        %480 = vperm.xlu0 %479, %v462
        %v481 = vpop.permute.xlu0 %480
        %484 = vset.pattern.permute.xlu0 0
        %485 = vperm.xlu0 %484, %v463
        %v486 = vpop.permute.xlu0 %485
        %489 = vset.pattern.permute.xlu0 0
        %490 = vperm.xlu0 %489, %v464
        %v491 = vpop.permute.xlu0 %490
        %494 = vset.pattern.permute.xlu0 0
        %495 = vperm.xlu0 %494, %v465
        %v496 = vpop.permute.xlu0 %495
        %499 = vset.pattern.permute.xlu0 0
        %500 = vperm.xlu0 %499, %v466
        %v501 = vpop.permute.xlu0 %500
        %504 = vset.pattern.permute.xlu0 0
        %505 = vperm.xlu0 %504, %v467
        %v506 = vpop.permute.xlu0 %505
        %v508 = vmul.f32 %v452, %v471
        %v509 = vmul.f32 %v453, %v476
        %v510 = vmul.f32 %v454, %v481
        %v511 = vmul.f32 %v455, %v486
        %v512 = vmul.f32 %v456, %v491
        %v513 = vmul.f32 %v457, %v496
        %v514 = vmul.f32 %v458, %v501
        %v515 = vmul.f32 %v459, %v506
        %v516 = vld [vmem:[%s3] sm:$0x1]
        %v518 = vlaneseq
        %v519 = vshrl.u32 %v518, 7
        %v520 = vsub.s32 0, %v519
        %v521 = vrot.slane %v516, %v520
        %v523 = vadd.f32 %v508, %v521
        %v524 = vadd.f32 %v509, %v521
        %v525 = vadd.f32 %v510, %v521
        %v526 = vadd.f32 %v511, %v521
        %v527 = vadd.f32 %v512, %v521
        %v528 = vadd.f32 %v513, %v521
        %v529 = vadd.f32 %v514, %v521
        %v530 = vadd.f32 %v515, %v521
        %531 = vst [vmem:[%s244] sm:$0xff] %v523
        %532 = vst [vmem:[%s244 + $0x8] sm:$0xff] %v524
        %533 = vst [vmem:[%s244 + $0x10] sm:$0xff] %v525
        %534 = vst [vmem:[%s244 + $0x18] sm:$0xff] %v526
        %535 = vst [vmem:[%s244 + $0x20] sm:$0xff] %v527
        %536 = vst [vmem:[%s244 + $0x28] sm:$0xff] %v528
        %537 = vst [vmem:[%s244 + $0x30] sm:$0xff] %v529
        %538 = vst [vmem:[%s244 + $0x38] sm:$0xff] %v530
      $region44: #{gnn_forward.7} parent=35 // pred_fallthru
        _
      %s539 = smul.u32 8, %s19
      %p540 = scmp.lt.s32.totalorder %s539, 15
      %s541 = scalar_select %p540, %s539, 15
      %s542 = smul.addr %s541, 8
      %s543 = scalar_lea.vmem %s4, %s542
      // Predicated region
      $region45: #{gnn_forward.7} parent=35 // pred_check
        %p544 = pneg %p141
      $region46: #{gnn_forward.7} parent=35 // pred_check_branch
        %546 = sbr.rel (%p544) target = $region48
      $region47: #{gnn_forward.7} parent=35 // pred_region
        %s547 = smul.u32 8, %s19
      $region48: #{gnn_forward.7} parent=35 // pred_fallthru
        _
    $region36: #{gnn_forward.7} parent=5 // pred_fallthru
      _
    %p548 = scmp.le.s32.totalorder 2, %s10
    // Predicated region
    $region49: #{gnn_forward.7} parent=5 // pred_check
      %p549 = pneg %p548
    $region50: #{gnn_forward.7} parent=5 // pred_check_branch
      %551 = sbr.rel (%p549) target = $region52
    $region51: #{gnn_forward.7} parent=5 // pred_region
      %s552 = ssub.s32 %s10, 2
      // Predicated region
      $region53: #{gnn_forward.7} parent=51 // pred_check
        %p553 = pneg %p147
      $region54: #{gnn_forward.7} parent=51 // pred_check_branch
        %555 = sbr.rel (%p553) target = $region56
      $region55: #{gnn_forward.7} parent=51 // pred_region
        %s556 = smul.u32 8, %s21
        %p557 = scmp.lt.s32.totalorder %s556, 15
        %s558 = scalar_select %p557, %s556, 15
        %s559 = smul.addr %s558, 8
        %s560 = scalar_lea.vmem %s4, %s559
      $region56: #{gnn_forward.7} parent=51 // pred_fallthru
        _
    $region52: #{gnn_forward.7} parent=5 // pred_fallthru
      _
  $region6: #{gnn_forward.7} parent=0 // loop_footer
    %s14 = sadd.s32 1, %s10
  $region7: #{gnn_forward.7} parent=0 // loop_footer_branch
    %9 = sbr.rel target = $region3
  $region8: #{gnn_forward.7} parent=0 // loop_exit
    _

// kernel: gnn_forward.5
$region0: #{gnn_forward.5}
  #allocation0 [shape = 'u32[]', space=smem, size = 0x4, offset = 0x4, fixed_abs, tag = 'smem constant byte address 0x4 - core index']
  #allocation1 [shape = 'u32[144,128]{1,0:T(1,128)}', space=vmem, size = 0x12000, scoped, tag = 'internal scratch']
  #allocation2 [shape = 'f32[64,128]{1,0:T(8,128)}', space=vmem, size = 0x8000, scoped, tag = 'scratch operand']
  %s0 = inlined_call_operand.vmem [shape: bf16[128,128], index: 0, kind: input, shape index: {}]
  %s1 = inlined_call_operand.vmem [shape: bf16[128,128], index: 1, kind: input, shape index: {}]
  %s2 = inlined_call_operand.vmem [shape: f32[128,1], index: 2, kind: input, shape index: {}]
  %s3 = inlined_call_operand.vmem [shape: f32[1,128], index: 3, kind: input, shape index: {}]
  %s4 = inlined_call_operand.vmem [shape: bf16[128,128], index: 4, kind: output, shape index: {}]
  %s5 = sld [smem:[#allocation0]]
  $region57: #{gnn_forward.5} parent=0
    _
  %s7 = ssub.s32 1, %s5
  %s8 = scalar_select 0, %s7, %s5
  loop: start=0, step=1, limit=4
  $region2: #{gnn_forward.5} parent=0 // loop_pre_header
    _
  $region3: #{gnn_forward.5} parent=0 // loop_header
    %s10 = sphi 0, %s14
    %p11 = scmp.ge.s32.totalorder %s10, 4
    %s17 = sphi 0, %s29
    %s18 = sphi 0, %s25
    %s19 = sphi 0, %s17
    %s20 = sphi 0, %s18
    %s21 = sphi 0, %s19
    %s22 = sphi 0, %s20
    %s34 = sphi 0, %s36
    %s37 = sphi 0, %s34
    %s38 = sphi 0, %s37
    %s54 = sphi 0, %s38
    %s58 = sphi 0, %s58
    %s60 = sphi 0, %s58
    %s61 = sphi 0, %s60
    %s75 = sphi 0, %s61
    %s81 = sphi 0, %s83
    %s84 = sphi 0, %s81
    %s85 = sphi 0, %s84
    %s101 = sphi 0, %s85
    %s105 = sphi 0, %s105
    %s107 = sphi 0, %s105
    %s108 = sphi 0, %s107
    %s122 = sphi 0, %s108
    %s128 = sphi 0, %s130
    %s131 = sphi 0, %s128
    %s132 = sphi 0, %s131
    %s148 = sphi 0, %s132
  $region4: #{gnn_forward.5} parent=0 // loop_header_branch
    %13 = sbr.rel (%p11) target = $region8
  $region5: #{gnn_forward.5} parent=0 // loop_body
    %s15 = ssub.s32 %s10, 1
    %s16 = ssub.s32 %s10, 2
    %s23 = sadd.s32 1, %s18
    %p24 = scmp.ge.s32.totalorder %s23, 1
    %s25 = scalar_select %p24, 0, %s23
    %s26 = sadd.s32 1, %s17
    %s27 = scalar_select %p24, %s26, %s17
    %p28 = scmp.ge.s32.totalorder %s27, 2
    %s29 = scalar_select %p28, 0, %s27
    %s30 = ssub.s32 %s17, %s29
    %s31 = ssub.s32 %s18, %s25
    %s32 = sor.u32 %s30, %s31
    %p33 = scmp.eq.s32.totalorder %s32, 0
    %s35 = sadd.s32 %s34, 1
    %s36 = scalar_select %p33, %s34, %s35
    %p39 = pneg %p33
    %p40 = scmp.eq.s32.totalorder %s10, 1
    %p41 = por %p39, %p40
    %p42 = scmp.ne.s32.totalorder %s34, %s37
    %p43 = scmp.eq.s32.totalorder %s10, 0
    %p44 = por %p42, %p43
    %p45 = scmp.ne.s32.totalorder %s34, %s37
    %p46 = scmp.eq.s32.totalorder %s15, 1
    %p47 = por %p45, %p46
    %p48 = scmp.ne.s32.totalorder %s37, %s38
    %p49 = scmp.eq.s32.totalorder %s15, 0
    %p50 = por %p48, %p49
    %p51 = scmp.ne.s32.totalorder %s37, %s38
    %p52 = scmp.eq.s32.totalorder %s16, 1
    %p53 = por %p51, %p52
    %p55 = scmp.ne.s32.totalorder %s38, %s54
    %p56 = scmp.eq.s32.totalorder %s16, 0
    %p57 = por %p55, %p56
    %s59 = sadd.s32 %s58, 1
    %p62 = scmp.eq.s32.totalorder %s10, 1
    %p63 = scmp.ne.s32.totalorder %s58, %s60
    %p64 = scmp.eq.s32.totalorder %s10, 0
    %p65 = por %p63, %p64
    %p66 = scmp.ne.s32.totalorder %s58, %s60
    %p67 = scmp.eq.s32.totalorder %s15, 1
    %p68 = por %p66, %p67
    %p69 = scmp.ne.s32.totalorder %s60, %s61
    %p70 = scmp.eq.s32.totalorder %s15, 0
    %p71 = por %p69, %p70
    %p72 = scmp.ne.s32.totalorder %s60, %s61
    %p73 = scmp.eq.s32.totalorder %s16, 1
    %p74 = por %p72, %p73
    %p76 = scmp.ne.s32.totalorder %s61, %s75
    %p77 = scmp.eq.s32.totalorder %s16, 0
    %p78 = por %p76, %p77
    %s79 = ssub.s32 %s17, %s29
    %p80 = scmp.eq.s32.totalorder %s79, 0
    %s82 = sadd.s32 %s81, 1
    %s83 = scalar_select %p80, %s81, %s82
    %p86 = pneg %p80
    %p87 = scmp.eq.s32.totalorder %s10, 1
    %p88 = por %p86, %p87
    %p89 = scmp.ne.s32.totalorder %s81, %s84
    %p90 = scmp.eq.s32.totalorder %s10, 0
    %p91 = por %p89, %p90
    %p92 = scmp.ne.s32.totalorder %s81, %s84
    %p93 = scmp.eq.s32.totalorder %s15, 1
    %p94 = por %p92, %p93
    %p95 = scmp.ne.s32.totalorder %s84, %s85
    %p96 = scmp.eq.s32.totalorder %s15, 0
    %p97 = por %p95, %p96
    %p98 = scmp.ne.s32.totalorder %s84, %s85
    %p99 = scmp.eq.s32.totalorder %s16, 1
    %p100 = por %p98, %p99
    %p102 = scmp.ne.s32.totalorder %s85, %s101
    %p103 = scmp.eq.s32.totalorder %s16, 0
    %p104 = por %p102, %p103
    %s106 = sadd.s32 %s105, 1
    %p109 = scmp.eq.s32.totalorder %s10, 1
    %p110 = scmp.ne.s32.totalorder %s105, %s107
    %p111 = scmp.eq.s32.totalorder %s10, 0
    %p112 = por %p110, %p111
    %p113 = scmp.ne.s32.totalorder %s105, %s107
    %p114 = scmp.eq.s32.totalorder %s15, 1
    %p115 = por %p113, %p114
    %p116 = scmp.ne.s32.totalorder %s107, %s108
    %p117 = scmp.eq.s32.totalorder %s15, 0
    %p118 = por %p116, %p117
    %p119 = scmp.ne.s32.totalorder %s107, %s108
    %p120 = scmp.eq.s32.totalorder %s16, 1
    %p121 = por %p119, %p120
    %p123 = scmp.ne.s32.totalorder %s108, %s122
    %p124 = scmp.eq.s32.totalorder %s16, 0
    %p125 = por %p123, %p124
    %s126 = ssub.s32 %s17, %s29
    %p127 = scmp.eq.s32.totalorder %s126, 0
    %s129 = sadd.s32 %s128, 1
    %s130 = scalar_select %p127, %s128, %s129
    %p133 = pneg %p127
    %p134 = scmp.eq.s32.totalorder %s10, 1
    %p135 = por %p133, %p134
    %p136 = scmp.ne.s32.totalorder %s128, %s131
    %p137 = scmp.eq.s32.totalorder %s10, 0
    %p138 = por %p136, %p137
    %p139 = scmp.ne.s32.totalorder %s128, %s131
    %p140 = scmp.eq.s32.totalorder %s15, 1
    %p141 = por %p139, %p140
    %p142 = scmp.ne.s32.totalorder %s131, %s132
    %p143 = scmp.eq.s32.totalorder %s15, 0
    %p144 = por %p142, %p143
    %p145 = scmp.ne.s32.totalorder %s131, %s132
    %p146 = scmp.eq.s32.totalorder %s16, 1
    %p147 = por %p145, %p146
    %p149 = scmp.ne.s32.totalorder %s132, %s148
    %p150 = scmp.eq.s32.totalorder %s16, 0
    %p151 = por %p149, %p150
    %p152 = scmp.le.s32.totalorder 1, %s10
    %p153 = scmp.lt.s32.totalorder %s10, 3
    %p154 = pnand %p152, %p153
    %p155 = pneg %p154
    // Predicated region
    $region9: #{gnn_forward.5} parent=5 // pred_check
      _
    $region10: #{gnn_forward.5} parent=5 // pred_check_branch
      %157 = sbr.rel (%p154) target = $region12
    $region11: #{gnn_forward.5} parent=5 // pred_region
      %s158 = ssub.s32 %s10, 1
      // Predicated region
      $region13: #{gnn_forward.5} parent=11 // pred_check
        %p159 = pneg %p71
      $region14: #{gnn_forward.5} parent=11 // pred_check_branch
        %161 = sbr.rel (%p159) target = $region16
      $region15: #{gnn_forward.5} parent=11 // pred_region
        _
      $region16: #{gnn_forward.5} parent=11 // pred_fallthru
        _
      // Predicated region
      $region17: #{gnn_forward.5} parent=11 // pred_check
        %p162 = pneg %p118
      $region18: #{gnn_forward.5} parent=11 // pred_check_branch
        %164 = sbr.rel (%p162) target = $region20
      $region19: #{gnn_forward.5} parent=11 // pred_region
        _
      $region20: #{gnn_forward.5} parent=11 // pred_fallthru
        _
    $region12: #{gnn_forward.5} parent=5 // pred_fallthru
      _
    %p165 = scmp.lt.s32.totalorder %s10, 2
    // Predicated region
    $region21: #{gnn_forward.5} parent=5 // pred_check
      %p166 = pneg %p165
    $region22: #{gnn_forward.5} parent=5 // pred_check_branch
      %168 = sbr.rel (%p166) target = $region24
    $region23: #{gnn_forward.5} parent=5 // pred_region
      // Predicated region
      $region25: #{gnn_forward.5} parent=23 // pred_check
        %p169 = pneg %p44
      $region26: #{gnn_forward.5} parent=23 // pred_check_branch
        %171 = sbr.rel (%p169) target = $region28
      $region27: #{gnn_forward.5} parent=23 // pred_region
        %s172 = smul.u32 8, %s17
        %p173 = scmp.lt.s32.totalorder %s172, 15
        %s174 = scalar_select %p173, %s172, 15
        %p175 = scmp.lt.s32.totalorder %s18, 0
        %s176 = scalar_select %p175, %s18, 0
        %s177 = sadd.s32 %s176, %s174
        %s178 = smul.addr %s177, 4
        %s179 = scalar_lea.vmem %s0, %s178
        %s180 = smul.u32 8, %s17
      $region28: #{gnn_forward.5} parent=23 // pred_fallthru
        _
      // Predicated region
      $region29: #{gnn_forward.5} parent=23 // pred_check
        %p181 = pneg %p91
      $region30: #{gnn_forward.5} parent=23 // pred_check_branch
        %183 = sbr.rel (%p181) target = $region32
      $region31: #{gnn_forward.5} parent=23 // pred_region
        %s184 = smul.u32 8, %s17
        %p185 = scmp.lt.s32.totalorder %s184, 15
        %s186 = scalar_select %p185, %s184, 15
        %s187 = smul.addr %s186, 8
        %s188 = scalar_lea.vmem %s2, %s187
        %s189 = smul.u32 8, %s17
      $region32: #{gnn_forward.5} parent=23 // pred_fallthru
        _
    $region24: #{gnn_forward.5} parent=5 // pred_fallthru
      _
    %p190 = scmp.le.s32.totalorder 1, %s10
    %p191 = scmp.lt.s32.totalorder %s10, 3
    %p192 = pnand %p190, %p191
    %p193 = pneg %p192
    // Predicated region
    $region33: #{gnn_forward.5} parent=5 // pred_check
      _
    $region34: #{gnn_forward.5} parent=5 // pred_check_branch
      %195 = sbr.rel (%p192) target = $region36
    $region35: #{gnn_forward.5} parent=5 // pred_region
      %s196 = ssub.s32 %s10, 1
      %s197 = smul.u32 8, %s19
      %p198 = scmp.lt.s32.totalorder %s197, 15
      %s199 = scalar_select %p198, %s197, 15
      %p200 = scmp.lt.s32.totalorder %s20, 0
      %s201 = scalar_select %p200, %s20, 0
      %s202 = sadd.s32 %s201, %s199
      %s203 = smul.addr %s202, 4
      %s204 = scalar_lea.vmem %s0, %s203
      %p205 = pneg %p50
      %p206 = pneg %p47
      %p207 = pneg %p71
      %p208 = pneg %p68
      %s209 = smul.u32 8, %s19
      %p210 = scmp.lt.s32.totalorder %s209, 15
      %s211 = scalar_select %p210, %s209, 15
      %s212 = smul.addr %s211, 8
      %s213 = scalar_lea.vmem %s2, %s212
      %p214 = pneg %p97
      %p215 = pneg %p94
      %p216 = pneg %p118
      %p217 = pneg %p115
      %p218 = pneg %p144
      %p219 = pneg %p141
      %s220 = smul.u32 8, %s19
      %p221 = scmp.lt.s32.totalorder %s220, 15
      %s222 = scalar_select %p221, %s220, 15
      %s223 = smul.addr %s222, 4
      %s224 = scalar_lea.vmem %s4, %s223
      %s225 = smul.u32 8, %s19
      %p226 = scmp.lt.s32.totalorder %s225, 15
      %s227 = scalar_select %p226, %s225, 15
      %p228 = scmp.lt.s32.totalorder %s20, 0
      %s229 = scalar_select %p228, %s20, 0
      %s230 = sadd.s32 %s229, %s227
      %s231 = smul.addr %s230, 4
      %s232 = scalar_lea.vmem %s0, %s231
      %s233 = smul.u32 8, %s19
      %s234 = smul.u32 8, %s19
      %p235 = scmp.lt.s32.totalorder %s234, 15
      %s236 = scalar_select %p235, %s234, 15
      %s237 = smul.addr %s236, 8
      %s238 = scalar_lea.vmem %s2, %s237
      %s239 = smul.u32 8, %s19
      %s240 = smul.u32 8, %s19
      %p241 = scmp.lt.s32.totalorder %s240, 15
      %s242 = scalar_select %p241, %s240, 15
      %s243 = smul.addr %s242, 4
      %s244 = scalar_lea.vmem %s4, %s243
      %s245 = smul.u32 8, %s19
      %p247 = scmp.eq.s32.totalorder %s20, 0
      // Predicated region
      $region37: #{gnn_forward.5} parent=35 // pred_check
        %p248 = pneg %p247
      $region38: #{gnn_forward.5} parent=35 // pred_check_branch
        %250 = sbr.rel (%p248) target = $region40
      $region39: #{gnn_forward.5} parent=35 // pred_region
        %251 = vst [vmem:[#allocation2] sm:$0xff] 0.0
        %252 = vst [vmem:[#allocation2 + $0x8] sm:$0xff] 0.0
        %253 = vst [vmem:[#allocation2 + $0x10] sm:$0xff] 0.0
        %254 = vst [vmem:[#allocation2 + $0x18] sm:$0xff] 0.0
        %255 = vst [vmem:[#allocation2 + $0x20] sm:$0xff] 0.0
        %256 = vst [vmem:[#allocation2 + $0x28] sm:$0xff] 0.0
        %257 = vst [vmem:[#allocation2 + $0x30] sm:$0xff] 0.0
        %258 = vst [vmem:[#allocation2 + $0x38] sm:$0xff] 0.0
      $region40: #{gnn_forward.5} parent=35 // pred_fallthru
        _
      %s259 = smul.u32 %s20, 128
      %s260 = sshra.s32 %s259, 3
      %s261 = sand.u32 %s259, 7
      %s262 = smul.addr %s260, 4
      %s263 = scalar_lea.vmem %s1, %s262
      %v264 = vld [vmem:[%s263] sm:$0xf]
      %v265 = vld [vmem:[%s263 + $0x4] sm:$0xf]
      %v266 = vld [vmem:[%s263 + $0x8] sm:$0xf]
      %v267 = vld [vmem:[%s263 + $0xc] sm:$0xf]
      %v268 = vld [vmem:[%s263 + $0x10] sm:$0xf]
      %v269 = vld [vmem:[%s263 + $0x14] sm:$0xf]
      %v270 = vld [vmem:[%s263 + $0x18] sm:$0xf]
      %v271 = vld [vmem:[%s263 + $0x1c] sm:$0xf]
      %v272 = vld [vmem:[%s263 + $0x20] sm:$0xf]
      %v273 = vld [vmem:[%s263 + $0x24] sm:$0xf]
      %v274 = vld [vmem:[%s263 + $0x28] sm:$0xf]
      %v275 = vld [vmem:[%s263 + $0x2c] sm:$0xf]
      %v276 = vld [vmem:[%s263 + $0x30] sm:$0xf]
      %v277 = vld [vmem:[%s263 + $0x34] sm:$0xf]
      %v278 = vld [vmem:[%s263 + $0x38] sm:$0xf]
      %v279 = vld [vmem:[%s263 + $0x3c] sm:$0xf]
      %v280 = vld [vmem:[#allocation2] sm:$0xff]
      %v281 = vld [vmem:[#allocation2 + $0x8] sm:$0xff]
      %v282 = vld [vmem:[#allocation2 + $0x10] sm:$0xff]
      %v283 = vld [vmem:[#allocation2 + $0x18] sm:$0xff]
      %v284 = vld [vmem:[#allocation2 + $0x20] sm:$0xff]
      %v285 = vld [vmem:[#allocation2 + $0x28] sm:$0xff]
      %v286 = vld [vmem:[#allocation2 + $0x30] sm:$0xff]
      %v287 = vld [vmem:[#allocation2 + $0x38] sm:$0xff]
      %v288 = vld [vmem:[%s232] sm:$0xf]
      %v289 = vld [vmem:[%s232 + $0x4] sm:$0xf]
      %v290 = vld [vmem:[%s232 + $0x8] sm:$0xf]
      %v291 = vld [vmem:[%s232 + $0xc] sm:$0xf]
      %v292 = vld [vmem:[%s232 + $0x10] sm:$0xf]
      %v293 = vld [vmem:[%s232 + $0x14] sm:$0xf]
      %v294 = vld [vmem:[%s232 + $0x18] sm:$0xf]
      %v295 = vld [vmem:[%s232 + $0x1c] sm:$0xf]
      %v304 = vunpack.c.l.b16 %v288
      %v305 = vunpack.c.l.b16 %v289
      %v306 = vunpack.c.l.b16 %v290
      %v307 = vunpack.c.l.b16 %v291
      %v308 = vunpack.c.l.b16 %v292
      %v309 = vunpack.c.l.b16 %v293
      %v310 = vunpack.c.l.b16 %v294
      %v311 = vunpack.c.l.b16 %v295
      %v312 = vpack.c.b16 %v305, %v304
      %v313 = vpack.c.b16 %v307, %v306
      %v314 = vpack.c.b16 %v309, %v308
      %v315 = vpack.c.b16 %v311, %v310
      %v336 = vunpack.c.l.b16 %v264
      %v337 = vunpack.c.l.b16 %v265
      %v338 = vunpack.c.l.b16 %v266
      %v339 = vunpack.c.l.b16 %v267
      %v340 = vunpack.c.l.b16 %v268
      %v341 = vunpack.c.l.b16 %v269
      %v342 = vunpack.c.l.b16 %v270
      %v343 = vunpack.c.l.b16 %v271
      %v344 = vunpack.c.l.b16 %v272
      %v345 = vunpack.c.l.b16 %v273
      %v346 = vunpack.c.l.b16 %v274
      %v347 = vunpack.c.l.b16 %v275
      %v348 = vunpack.c.l.b16 %v276
      %v349 = vunpack.c.l.b16 %v277
      %v350 = vunpack.c.l.b16 %v278
      %v351 = vunpack.c.l.b16 %v279
      %v352 = vpack.c.b16 %v337, %v336
      %v353 = vpack.c.b16 %v339, %v338
      %v354 = vpack.c.b16 %v341, %v340
      %v355 = vpack.c.b16 %v343, %v342
      %v356 = vpack.c.b16 %v345, %v344
      %v357 = vpack.c.b16 %v347, %v346
      %v358 = vpack.c.b16 %v349, %v348
      %v359 = vpack.c.b16 %v351, %v350
      %368 = vmatprep.subr.bf16.mxu0 0
      %369 = vmatpush1.bf16.msra.mxu0 %v352
      %370 = vmatprep.subr.bf16.mxu0 0
      %371 = vmatpush1.bf16.msra.mxu0 %v353
      %372 = vmatprep.subr.bf16.mxu0 0
      %373 = vmatpush1.bf16.msra.mxu0 %v354
      %374 = vmatprep.subr.bf16.mxu0 0
      %375 = vmatpush1.bf16.msra.mxu0 %v355
      %376 = vmatprep.subr.bf16.mxu0 0
      %377 = vmatpush1.bf16.msra.mxu0 %v356
      %378 = vmatprep.subr.bf16.mxu0 0
      %379 = vmatpush1.bf16.msra.mxu0 %v357
      %380 = vmatprep.subr.bf16.mxu0 0
      %381 = vmatpush1.bf16.msra.mxu0 %v358
      %382 = vmatprep.subr.bf16.mxu0 0
      %383 = vmatpush1.bf16.msra.mxu0 %v359
      %384 = vmatprep.subr.bf16.mxu0 0
      %385 = vmatpush1.bf16.msra.mxu0 0
      %386 = vmatprep.subr.bf16.mxu0 0
      %387 = vmatpush1.bf16.msra.mxu0 0
      %388 = vmatprep.subr.bf16.mxu0 0
      %389 = vmatpush1.bf16.msra.mxu0 0
      %390 = vmatprep.subr.bf16.mxu0 0
      %391 = vmatpush1.bf16.msra.mxu0 0
      %392 = vmatprep.subr.bf16.mxu0 0
      %393 = vmatpush1.bf16.msra.mxu0 0
      %394 = vmatprep.subr.bf16.mxu0 0
      %395 = vmatpush1.bf16.msra.mxu0 0
      %396 = vmatprep.subr.bf16.mxu0 0
      %397 = vmatpush1.bf16.msra.mxu0 0
      %398 = vmatprep.subr.bf16.mxu0 0
      %399 = vmatpush1.bf16.msra.mxu0 0
      %400 = vmatprep.mubr.bf16.mxu0 0
      %401 = vmatmul.mubr.bf16.gmra.mrb[0].mxu0 %v312
      %v402 = vpop.f32.mrb[0].mxu0
      %v403 = vadd.f32 0.0, %v402
      %v404 = vpop.f32.mrb[0].mxu0
      %v405 = vpop.f32.mrb[0].mxu0
      %v406 = vadd.f32 0.0, %v405
      %v407 = vpop.f32.mrb[0].mxu0
      %408 = vmatprep.mubr.bf16.mxu0 0
      %409 = vmatmul.mubr.bf16.gmra.mrb[0].mxu0 %v313
      %v410 = vpop.f32.mrb[0].mxu0
      %v411 = vadd.f32 0.0, %v410
      %v412 = vpop.f32.mrb[0].mxu0
      %v413 = vpop.f32.mrb[0].mxu0
      %v414 = vadd.f32 0.0, %v413
      %v415 = vpop.f32.mrb[0].mxu0
      %416 = vmatprep.mubr.bf16.mxu0 0
      %417 = vmatmul.mubr.bf16.gmra.mrb[0].mxu0 %v314
      %v418 = vpop.f32.mrb[0].mxu0
      %v419 = vadd.f32 0.0, %v418
      %v420 = vpop.f32.mrb[0].mxu0
      %v421 = vpop.f32.mrb[0].mxu0
      %v422 = vadd.f32 0.0, %v421
      %v423 = vpop.f32.mrb[0].mxu0
      %424 = vmatprep.mubr.bf16.mxu0 0
      %425 = vmatmul.mubr.bf16.gmra.mrb[0].mxu0 %v315
      %v426 = vpop.f32.mrb[0].mxu0
      %v427 = vadd.f32 0.0, %v426
      %v428 = vpop.f32.mrb[0].mxu0
      %v429 = vpop.f32.mrb[0].mxu0
      %v430 = vadd.f32 0.0, %v429
      %v431 = vpop.f32.mrb[0].mxu0
      %432 = vdwg.mxu0
      %v433 = vadd.f32 %v280, %v403
      %v434 = vadd.f32 %v281, %v406
      %v435 = vadd.f32 %v282, %v411
      %v436 = vadd.f32 %v283, %v414
      %v437 = vadd.f32 %v284, %v419
      %v438 = vadd.f32 %v285, %v422
      %v439 = vadd.f32 %v286, %v427
      %v440 = vadd.f32 %v287, %v430
      %441 = vst [vmem:[#allocation2] sm:$0xff] %v433
      %442 = vst [vmem:[#allocation2 + $0x8] sm:$0xff] %v434
      %443 = vst [vmem:[#allocation2 + $0x10] sm:$0xff] %v435
      %444 = vst [vmem:[#allocation2 + $0x18] sm:$0xff] %v436
      %445 = vst [vmem:[#allocation2 + $0x20] sm:$0xff] %v437
      %446 = vst [vmem:[#allocation2 + $0x28] sm:$0xff] %v438
      %447 = vst [vmem:[#allocation2 + $0x30] sm:$0xff] %v439
      %448 = vst [vmem:[#allocation2 + $0x38] sm:$0xff] %v440
      // Predicated region
      $region41: #{gnn_forward.5} parent=35 // pred_check
        %p449 = pneg %p247
      $region42: #{gnn_forward.5} parent=35 // pred_check_branch
        %451 = sbr.rel (%p449) target = $region44
      $region43: #{gnn_forward.5} parent=35 // pred_region
        %v452 = vld [vmem:[#allocation2] sm:$0xff]
        %v453 = vld [vmem:[#allocation2 + $0x8] sm:$0xff]
        %v454 = vld [vmem:[#allocation2 + $0x10] sm:$0xff]
        %v455 = vld [vmem:[#allocation2 + $0x18] sm:$0xff]
        %v456 = vld [vmem:[#allocation2 + $0x20] sm:$0xff]
        %v457 = vld [vmem:[#allocation2 + $0x28] sm:$0xff]
        %v458 = vld [vmem:[#allocation2 + $0x30] sm:$0xff]
        %v459 = vld [vmem:[#allocation2 + $0x38] sm:$0xff]
        %v460 = vld [vmem:[%s238] sm:$0xff]
        %v461 = vld [vmem:[%s238 + $0x8] sm:$0xff]
        %v462 = vld [vmem:[%s238 + $0x10] sm:$0xff]
        %v463 = vld [vmem:[%s238 + $0x18] sm:$0xff]
        %v464 = vld [vmem:[%s238 + $0x20] sm:$0xff]
        %v465 = vld [vmem:[%s238 + $0x28] sm:$0xff]
        %v466 = vld [vmem:[%s238 + $0x30] sm:$0xff]
        %v467 = vld [vmem:[%s238 + $0x38] sm:$0xff]
        %469 = vset.pattern.permute.xlu0 0
        %470 = vperm.xlu0 %469, %v460
        %v471 = vpop.permute.xlu0 %470
        %474 = vset.pattern.permute.xlu0 0
        %475 = vperm.xlu0 %474, %v461
        %v476 = vpop.permute.xlu0 %475
        %479 = vset.pattern.permute.xlu0 0
        %480 = vperm.xlu0 %479, %v462
        %v481 = vpop.permute.xlu0 %480
        %484 = vset.pattern.permute.xlu0 0
        %485 = vperm.xlu0 %484, %v463
        %v486 = vpop.permute.xlu0 %485
        %489 = vset.pattern.permute.xlu0 0
        %490 = vperm.xlu0 %489, %v464
        %v491 = vpop.permute.xlu0 %490
        %494 = vset.pattern.permute.xlu0 0
        %495 = vperm.xlu0 %494, %v465
        %v496 = vpop.permute.xlu0 %495
        %499 = vset.pattern.permute.xlu0 0
        %500 = vperm.xlu0 %499, %v466
        %v501 = vpop.permute.xlu0 %500
        %504 = vset.pattern.permute.xlu0 0
        %505 = vperm.xlu0 %504, %v467
        %v506 = vpop.permute.xlu0 %505
        %v508 = vmul.f32 %v452, %v471
        %v509 = vmul.f32 %v453, %v476
        %v510 = vmul.f32 %v454, %v481
        %v511 = vmul.f32 %v455, %v486
        %v512 = vmul.f32 %v456, %v491
        %v513 = vmul.f32 %v457, %v496
        %v514 = vmul.f32 %v458, %v501
        %v515 = vmul.f32 %v459, %v506
        %v516 = vld [vmem:[%s3] sm:$0x1]
        %v518 = vlaneseq
        %v519 = vshrl.u32 %v518, 7
        %v520 = vsub.s32 0, %v519
        %v521 = vrot.slane %v516, %v520
        %v523 = vadd.f32 %v508, %v521
        %v524 = vadd.f32 %v509, %v521
        %v525 = vadd.f32 %v510, %v521
        %v526 = vadd.f32 %v511, %v521
        %v527 = vadd.f32 %v512, %v521
        %v528 = vadd.f32 %v513, %v521
        %v529 = vadd.f32 %v514, %v521
        %v530 = vadd.f32 %v515, %v521
        %v531 = vmax.f32 %v523, 0.0
        %v532 = vmax.f32 %v524, 0.0
        %v533 = vmax.f32 %v525, 0.0
        %v534 = vmax.f32 %v526, 0.0
        %v535 = vmax.f32 %v527, 0.0
        %v536 = vmax.f32 %v528, 0.0
        %v537 = vmax.f32 %v529, 0.0
        %v538 = vmax.f32 %v530, 0.0
        %v539 = vpack.c.bf16 %v532, %v531
        %v540 = vpack.c.bf16 %v534, %v533
        %v541 = vpack.c.bf16 %v536, %v535
        %v542 = vpack.c.bf16 %v538, %v537
        %v547 = vunpack.c.l.b16 %v539
        %v548 = vunpack.c.h.b16 %v539
        %v549 = vunpack.c.l.b16 %v540
        %v550 = vunpack.c.h.b16 %v540
        %v551 = vunpack.c.l.b16 %v541
        %v552 = vunpack.c.h.b16 %v541
        %v553 = vunpack.c.l.b16 %v542
        %v554 = vunpack.c.h.b16 %v542
        %v555 = vpack.c.b16 %v547, %v547
        %v556 = vpack.c.b16 %v548, %v548
        %v557 = vpack.c.b16 %v549, %v549
        %v558 = vpack.c.b16 %v550, %v550
        %v559 = vpack.c.b16 %v551, %v551
        %v560 = vpack.c.b16 %v552, %v552
        %v561 = vpack.c.b16 %v553, %v553
        %v562 = vpack.c.b16 %v554, %v554
        %571 = vst [vmem:[%s244] sm:$0xf] %v555
        %572 = vst [vmem:[%s244 + $0x4] sm:$0xf] %v556
        %573 = vst [vmem:[%s244 + $0x8] sm:$0xf] %v557
        %574 = vst [vmem:[%s244 + $0xc] sm:$0xf] %v558
        %575 = vst [vmem:[%s244 + $0x10] sm:$0xf] %v559
        %576 = vst [vmem:[%s244 + $0x14] sm:$0xf] %v560
        %577 = vst [vmem:[%s244 + $0x18] sm:$0xf] %v561
        %578 = vst [vmem:[%s244 + $0x1c] sm:$0xf] %v562
      $region44: #{gnn_forward.5} parent=35 // pred_fallthru
        _
      %s579 = smul.u32 8, %s19
      %p580 = scmp.lt.s32.totalorder %s579, 15
      %s581 = scalar_select %p580, %s579, 15
      %s582 = smul.addr %s581, 4
      %s583 = scalar_lea.vmem %s4, %s582
      // Predicated region
      $region45: #{gnn_forward.5} parent=35 // pred_check
        %p584 = pneg %p141
      $region46: #{gnn_forward.5} parent=35 // pred_check_branch
        %586 = sbr.rel (%p584) target = $region48
      $region47: #{gnn_forward.5} parent=35 // pred_region
        %s587 = smul.u32 8, %s19
      $region48: #{gnn_forward.5} parent=35 // pred_fallthru
        _
    $region36: #{gnn_forward.5} parent=5 // pred_fallthru
      _
    %p588 = scmp.le.s32.totalorder 2, %s10
    // Predicated region
    $region49: #{gnn_forward.5} parent=5 // pred_check
      %p589 = pneg %p588
    $region50: #{gnn_forward.5} parent=5 // pred_check_branch
      %591 = sbr.rel (%p589) target = $region52
    $region51: #{gnn_forward.5} parent=5 // pred_region
      %s592 = ssub.s32 %s10, 2
      // Predicated region
      $region53: #{gnn_forward.5} parent=51 // pred_check
        %p593 = pneg %p147
      $region54: #{gnn_forward.5} parent=51 // pred_check_branch
        %595 = sbr.rel (%p593) target = $region56
      $region55: #{gnn_forward.5} parent=51 // pred_region
        %s596 = smul.u32 8, %s21
        %p597 = scmp.lt.s32.totalorder %s596, 15
        %s598 = scalar_select %p597, %s596, 15
        %s599 = smul.addr %s598, 4
        %s600 = scalar_lea.vmem %s4, %s599
      $region56: #{gnn_forward.5} parent=51 // pred_fallthru
        _
    $region52: #{gnn_forward.5} parent=5 // pred_fallthru
      _
  $region6: #{gnn_forward.5} parent=0 // loop_footer
    %s14 = sadd.s32 1, %s10
  $region7: #{gnn_forward.5} parent=0 // loop_footer_branch
    %9 = sbr.rel target = $region3
  $region8: #{gnn_forward.5} parent=0 // loop_exit
    _

</llo_original>
